<compile_context>
chip_gen: v7x
topology: tpu7x:2x2x1
jax: 0.10.0
libtpu: 0.0.40
codegen_flags: <defaults>
</compile_context>

<pallas_src>
import jax
import jax.numpy as jnp
from jax.experimental import pallas as pl
from jax.experimental.pallas import tpu as pltpu

IN_DIM = 28 * 28 * 1   # 784
H1, H2 = 300, 100
OUT_DIM = 10
OUT_PAD = 128          # lane-dense padded output width
TILE_B_MAX = 512       # rows per grid step (multiple of 16 for bf16 sublanes)


def mlp_kernel(x_ref, w1_ref, b1_ref, w2_ref, b2_ref, w3_ref, b3_ref, o_ref):
    # fc1 + ReLU (bf16 operands, f32 accumulation on the MXU)
    h1 = jnp.dot(x_ref[...], w1_ref[...], preferred_element_type=jnp.float32)
    h1 = jnp.maximum(h1 + b1_ref[...], 0.0)
    # fc2 + ReLU
    h2 = jnp.dot(h1.astype(jnp.bfloat16), w2_ref[...],
                 preferred_element_type=jnp.float32)
    h2 = jnp.maximum(h2 + b2_ref[...], 0.0)
    # fc3 (no activation), lane-dense 128-wide store
    h3 = jnp.dot(h2.astype(jnp.bfloat16), w3_ref[...],
                 preferred_element_type=jnp.float32)
    o_ref[...] = (h3 + b3_ref[...]).astype(o_ref.dtype)


@jax.jit
def mlp_forward(x, params):
    """x: (B, 1, 28, 28) float32 (NCHW). Returns logits (B, 10) float32."""
    w1, b1, w2, b2, w3, b3 = params
    B = x.shape[0]
    x2d = x.reshape(B, IN_DIM)  # same semantics as torch .view(-1, 784)

    # Batch tiling: tile_b multiple of 16 (bf16 sublane packing),
    # padded batch a multiple of tile_b. Padded rows are sliced off at the end.
    b16 = ((B + 15) // 16) * 16
    tile_b = min(TILE_B_MAX, b16)
    Bp = ((B + tile_b - 1) // tile_b) * tile_b
    if Bp != B:
        x2d = jnp.pad(x2d, ((0, Bp - B), (0, 0)))

    # bf16 matmul operands; biases stay f32. Last layer padded to 128 lanes.
    x_bf = x2d.astype(jnp.bfloat16)
    w1b = w1.astype(jnp.bfloat16)
    w2b = w2.astype(jnp.bfloat16)
    w3b = jnp.pad(w3, ((0, 0), (0, OUT_PAD - OUT_DIM))).astype(jnp.bfloat16)
    b3p = jnp.pad(b3, ((0, 0), (0, OUT_PAD - OUT_DIM)))

    grid = (Bp // tile_b,)
    const = lambda i: (0, 0)  # weights/biases: DMA'd once, resident in VMEM

    flops = 2 * Bp * (IN_DIM * H1 + H1 * H2 + H2 * OUT_DIM)
    bytes_accessed = (
        Bp * IN_DIM * 2                                   # x stream (bf16)
        + (IN_DIM * H1 + H1 * H2 + H2 * OUT_PAD) * 2      # weights (bf16)
        + (H1 + H2 + OUT_PAD) * 4                         # biases (f32)
        + Bp * OUT_PAD * 4                                # output (f32)
    )

    out = pl.pallas_call(
        mlp_kernel,
        out_shape=jax.ShapeDtypeStruct((Bp, OUT_PAD), jnp.float32),
        grid=grid,
        in_specs=[
            pl.BlockSpec((tile_b, IN_DIM), lambda i: (i, 0)),   # x: batch-tiled
            pl.BlockSpec((IN_DIM, H1), const),                  # w1 resident
            pl.BlockSpec((1, H1), const),                       # b1 resident
            pl.BlockSpec((H1, H2), const),                      # w2 resident
            pl.BlockSpec((1, H2), const),                       # b2 resident
            pl.BlockSpec((H2, OUT_PAD), const),                 # w3 resident
            pl.BlockSpec((1, OUT_PAD), const),                  # b3 resident
        ],
        out_specs=pl.BlockSpec((tile_b, OUT_PAD), lambda i: (i, 0)),
        compiler_params=pltpu.CompilerParams(
            dimension_semantics=("parallel",)),
        cost_estimate=pl.CostEstimate(
            flops=flops, transcendentals=0, bytes_accessed=bytes_accessed),
    )(x_bf, w1b, b1, w2b, b2, w3b, b3p)

    return out[:B, :OUT_DIM]


def init_params(key):
    """Deterministic parameter init (shapes match the nn.Linear layers)."""
    k1, k2, k3, k4, k5, k6 = jax.random.split(key, 6)

    def lin(kw, kb, fan_in, fan_out):
        bound = 1.0 / jnp.sqrt(fan_in)
        w = jax.random.uniform(kw, (fan_in, fan_out), jnp.float32, -bound, bound)
        b = jax.random.uniform(kb, (1, fan_out), jnp.float32, -bound, bound)
        return w, b

    w1, b1 = lin(k1, k2, IN_DIM, H1)
    w2, b2 = lin(k3, k4, H1, H2)
    w3, b3 = lin(k5, k6, H2, OUT_DIM)
    return (w1, b1, w2, b2, w3, b3)


def _ref_bf16(xf, params):
    """Pure-JAX reference using the same bf16-operand / f32-accumulate recipe."""
    w1, b1, w2, b2, w3, b3 = params
    bf = jnp.bfloat16
    h = jnp.dot(xf.astype(bf), w1.astype(bf),
                preferred_element_type=jnp.float32) + b1
    h = jnp.maximum(h, 0.0)
    h = jnp.dot(h.astype(bf), w2.astype(bf),
                preferred_element_type=jnp.float32) + b2
    h = jnp.maximum(h, 0.0)
    return jnp.dot(h.astype(bf), w3.astype(bf),
                   preferred_element_type=jnp.float32) + b3


if __name__ == "__main__":
    key = jax.random.PRNGKey(0)
    kp, kx = jax.random.split(key)
    params = init_params(kp)

    # Small-shape smoke test (B = 2), exactly the module's input layout.
    B = 2
    x = jax.random.normal(kx, (B, 1, 28, 28), dtype=jnp.float32)
    out = mlp_forward(x, params)
    jax.block_until_ready(out)
    assert out.shape == (B, 10)

    xf = x.reshape(B, IN_DIM)
    ref = _ref_bf16(xf, params)
    assert jnp.allclose(out, ref, atol=5e-3, rtol=5e-3), "mismatch vs bf16 ref"

    # Loose check against the exact f32 PyTorch math (bf16 operands => ~1e-2).
    w1, b1, w2, b2, w3, b3 = params
    ref32 = jnp.maximum(xf @ w1 + b1, 0.0)
    ref32 = jnp.maximum(ref32 @ w2 + b2, 0.0)
    ref32 = ref32 @ w3 + b3
    assert jnp.allclose(out, ref32, atol=5e-2, rtol=5e-2), "mismatch vs f32 ref"

    # Exercise the multi-tile grid + batch-padding path as well.
    B2 = 530
    x2 = jax.random.normal(jax.random.PRNGKey(1), (B2, 1, 28, 28), jnp.float32)
    out2 = mlp_forward(x2, params)
    jax.block_until_ready(out2)
    assert out2.shape == (B2, 10)
    ref2 = _ref_bf16(x2.reshape(B2, IN_DIM), params)
    assert jnp.allclose(out2, ref2, atol=5e-3, rtol=5e-3), "multi-tile mismatch"

    print("KERNEL_OK")
</pallas_src>

<mosaic_0001>
module attributes {stable_mosaic.version = 11 : i64} {
  func.func @mlp_kernel(%arg0: i32, %arg1: memref<16x784xbf16, #tpu.memory_space<vmem>>, %arg2: memref<784x300xbf16, #tpu.memory_space<vmem>>, %arg3: memref<1x300xf32, #tpu.memory_space<vmem>>, %arg4: memref<300x100xbf16, #tpu.memory_space<vmem>>, %arg5: memref<1x100xf32, #tpu.memory_space<vmem>>, %arg6: memref<100x128xbf16, #tpu.memory_space<vmem>>, %arg7: memref<1x128xf32, #tpu.memory_space<vmem>>, %arg8: memref<16x128xf32, #tpu.memory_space<vmem>>) attributes {dimension_semantics = [#tpu.dimension_semantics<parallel>], iteration_bounds = array<i64: 1>, scalar_prefetch = 0 : i64, scratch_operands = 0 : i64, tpu.core_type = #tpu.core_type<tc>, window_params = [{transform_indices = @transform_0, window_bounds = array<i64: 16, 784>}, {pipeline_mode = #tpu.pipeline_mode<synchronous>, transform_indices = @transform_1, window_bounds = array<i64: 784, 300>}, {pipeline_mode = #tpu.pipeline_mode<synchronous>, transform_indices = @transform_2, window_bounds = array<i64: 1, 300>}, {pipeline_mode = #tpu.pipeline_mode<synchronous>, transform_indices = @transform_3, window_bounds = array<i64: 300, 100>}, {pipeline_mode = #tpu.pipeline_mode<synchronous>, transform_indices = @transform_4, window_bounds = array<i64: 1, 100>}, {pipeline_mode = #tpu.pipeline_mode<synchronous>, transform_indices = @transform_5, window_bounds = array<i64: 100, 128>}, {pipeline_mode = #tpu.pipeline_mode<synchronous>, transform_indices = @transform_6, window_bounds = array<i64: 1, 128>}, {transform_indices = @transform_7, window_bounds = array<i64: 16, 128>}]} {
    %c0 = arith.constant 0 : index
    %c0_0 = arith.constant 0 : index
    %0 = vector.load %arg1[%c0, %c0_0] : memref<16x784xbf16, #tpu.memory_space<vmem>>, vector<16x784xbf16>
    %c0_1 = arith.constant 0 : index
    %c0_2 = arith.constant 0 : index
    %1 = vector.load %arg2[%c0_1, %c0_2] : memref<784x300xbf16, #tpu.memory_space<vmem>>, vector<784x300xbf16>
    %cst = arith.constant dense<0.000000e+00> : vector<16x300xf32>
    %2 = tpu.matmul %0, %1, %cst {dimension_numbers = #tpu.dot_dimension_numbers<[1], [0], [0], [1], [0, 0, 1, 1], [], []>} : vector<16x784xbf16>, vector<784x300xbf16>, vector<16x300xf32> -> vector<16x300xf32>
    %c0_3 = arith.constant 0 : index
    %c0_4 = arith.constant 0 : index
    %3 = vector.load %arg3[%c0_3, %c0_4] : memref<1x300xf32, #tpu.memory_space<vmem>>, vector<1x300xf32>
    %4 = vector.broadcast %3 : vector<1x300xf32> to vector<16x300xf32>
    %5 = arith.addf %2, %4 : vector<16x300xf32>
    %cst_5 = arith.constant 0.000000e+00 : f32
    %6 = vector.broadcast %cst_5 : f32 to vector<16x300xf32>
    %7 = arith.maximumf %5, %6 : vector<16x300xf32>
    %8 = arith.truncf %7 : vector<16x300xf32> to vector<16x300xbf16>
    %c0_6 = arith.constant 0 : index
    %c0_7 = arith.constant 0 : index
    %9 = vector.load %arg4[%c0_6, %c0_7] : memref<300x100xbf16, #tpu.memory_space<vmem>>, vector<300x100xbf16>
    %cst_8 = arith.constant dense<0.000000e+00> : vector<16x100xf32>
    %10 = tpu.matmul %8, %9, %cst_8 {dimension_numbers = #tpu.dot_dimension_numbers<[1], [0], [0], [1], [0, 0, 1, 1], [], []>} : vector<16x300xbf16>, vector<300x100xbf16>, vector<16x100xf32> -> vector<16x100xf32>
    %c0_9 = arith.constant 0 : index
    %c0_10 = arith.constant 0 : index
    %11 = vector.load %arg5[%c0_9, %c0_10] : memref<1x100xf32, #tpu.memory_space<vmem>>, vector<1x100xf32>
    %12 = vector.broadcast %11 : vector<1x100xf32> to vector<16x100xf32>
    %13 = arith.addf %10, %12 : vector<16x100xf32>
    %cst_11 = arith.constant 0.000000e+00 : f32
    %14 = vector.broadcast %cst_11 : f32 to vector<16x100xf32>
    %15 = arith.maximumf %13, %14 : vector<16x100xf32>
    %16 = arith.truncf %15 : vector<16x100xf32> to vector<16x100xbf16>
    %c0_12 = arith.constant 0 : index
    %c0_13 = arith.constant 0 : index
    %17 = vector.load %arg6[%c0_12, %c0_13] : memref<100x128xbf16, #tpu.memory_space<vmem>>, vector<100x128xbf16>
    %cst_14 = arith.constant dense<0.000000e+00> : vector<16x128xf32>
    %18 = tpu.matmul %16, %17, %cst_14 {dimension_numbers = #tpu.dot_dimension_numbers<[1], [0], [0], [1], [0, 0, 1, 1], [], []>} : vector<16x100xbf16>, vector<100x128xbf16>, vector<16x128xf32> -> vector<16x128xf32>
    %c0_15 = arith.constant 0 : index
    %c0_16 = arith.constant 0 : index
    %19 = vector.load %arg7[%c0_15, %c0_16] : memref<1x128xf32, #tpu.memory_space<vmem>>, vector<1x128xf32>
    %20 = vector.broadcast %19 : vector<1x128xf32> to vector<16x128xf32>
    %21 = arith.addf %18, %20 : vector<16x128xf32>
    %c0_17 = arith.constant 0 : index
    %c0_18 = arith.constant 0 : index
    %22 = vector.load %arg8[%c0_17, %c0_18] : memref<16x128xf32, #tpu.memory_space<vmem>>, vector<16x128xf32>
    tpu.vector_store %arg8[%c0_17, %c0_18], %21 {strides = array<i32>} : memref<16x128xf32, #tpu.memory_space<vmem>>, vector<16x128xf32>,
    return
  }
  func.func @transform_0(%arg0: i32) -> (i32, i32) {
    %c0_i32 = arith.constant 0 : i32
    %c0_i32_0 = arith.constant 0 : i32
    return %arg0, %c0_i32 : i32, i32
  }
  func.func @transform_1(%arg0: i32) -> (i32, i32) {
    %c0_i32 = arith.constant 0 : i32
    %c0_i32_0 = arith.constant 0 : i32
    %c0_i32_1 = arith.constant 0 : i32
    return %c0_i32, %c0_i32_0 : i32, i32
  }
  func.func @transform_2(%arg0: i32) -> (i32, i32) {
    %c0_i32 = arith.constant 0 : i32
    %c0_i32_0 = arith.constant 0 : i32
    %c0_i32_1 = arith.constant 0 : i32
    return %c0_i32, %c0_i32_0 : i32, i32
  }
  func.func @transform_3(%arg0: i32) -> (i32, i32) {
    %c0_i32 = arith.constant 0 : i32
    %c0_i32_0 = arith.constant 0 : i32
    %c0_i32_1 = arith.constant 0 : i32
    return %c0_i32, %c0_i32_0 : i32, i32
  }
  func.func @transform_4(%arg0: i32) -> (i32, i32) {
    %c0_i32 = arith.constant 0 : i32
    %c0_i32_0 = arith.constant 0 : i32
    %c0_i32_1 = arith.constant 0 : i32
    return %c0_i32, %c0_i32_0 : i32, i32
  }
  func.func @transform_5(%arg0: i32) -> (i32, i32) {
    %c0_i32 = arith.constant 0 : i32
    %c0_i32_0 = arith.constant 0 : i32
    %c0_i32_1 = arith.constant 0 : i32
    return %c0_i32, %c0_i32_0 : i32, i32
  }
  func.func @transform_6(%arg0: i32) -> (i32, i32) {
    %c0_i32 = arith.constant 0 : i32
    %c0_i32_0 = arith.constant 0 : i32
    %c0_i32_1 = arith.constant 0 : i32
    return %c0_i32, %c0_i32_0 : i32, i32
  }
  func.func @transform_7(%arg0: i32) -> (i32, i32) {
    %c0_i32 = arith.constant 0 : i32
    %c0_i32_0 = arith.constant 0 : i32
    return %arg0, %c0_i32 : i32, i32
  }
}

</mosaic_0001>

<llo_original>
// kernel: mlp_forward.1
$region0: #{mlp_forward.1}
  #allocation0 [shape = 'u32[]', space=smem, size = 0x4, offset = 0x4, fixed_abs, tag = 'smem constant byte address 0x4 - core index']
  #allocation1 [shape = 'u32[144,128]{1,0:T(1,128)}', space=vmem, size = 0x12000, scoped, tag = 'internal scratch']
  %s0 = inlined_call_operand.vmem [shape: bf16[16,784], index: 0, kind: input, shape index: {}]
  %s1 = inlined_call_operand.vmem [shape: bf16[784,300], index: 1, kind: input, shape index: {}]
  %s2 = inlined_call_operand.vmem [shape: f32[1,300], index: 2, kind: input, shape index: {}]
  %s3 = inlined_call_operand.vmem [shape: bf16[300,100], index: 3, kind: input, shape index: {}]
  %s4 = inlined_call_operand.vmem [shape: f32[1,100], index: 4, kind: input, shape index: {}]
  %s5 = inlined_call_operand.vmem [shape: bf16[100,128], index: 5, kind: input, shape index: {}]
  %s6 = inlined_call_operand.vmem [shape: f32[1,128], index: 6, kind: input, shape index: {}]
  %s7 = inlined_call_operand.vmem [shape: f32[16,128], index: 7, kind: output, shape index: {}]
  %s8 = sld [smem:[#allocation0]]
  $region38: #{mlp_forward.1} parent=0
    _
  %s10 = ssub.s32 1, %s8
  %s11 = scalar_select 0, %s10, %s8
  // Predicated region
  $region2: #{mlp_forward.1} parent=0 // pred_check
    _
  $region3: #{mlp_forward.1} parent=0 // pred_check_branch
    %13 = sbr.rel (0) target = $region5
  $region4: #{mlp_forward.1} parent=0 // pred_region
    _
  $region5: #{mlp_forward.1} parent=0 // pred_fallthru
    _
  // Predicated region
  $region6: #{mlp_forward.1} parent=0 // pred_check
    _
  $region7: #{mlp_forward.1} parent=0 // pred_check_branch
    %15 = sbr.rel (0) target = $region9
  $region8: #{mlp_forward.1} parent=0 // pred_region
    _
  $region9: #{mlp_forward.1} parent=0 // pred_fallthru
    _
  // Predicated region
  $region10: #{mlp_forward.1} parent=0 // pred_check
    _
  $region11: #{mlp_forward.1} parent=0 // pred_check_branch
    %17 = sbr.rel (0) target = $region13
  $region12: #{mlp_forward.1} parent=0 // pred_region
    _
  $region13: #{mlp_forward.1} parent=0 // pred_fallthru
    _
  // Predicated region
  $region14: #{mlp_forward.1} parent=0 // pred_check
    _
  $region15: #{mlp_forward.1} parent=0 // pred_check_branch
    %19 = sbr.rel (0) target = $region17
  $region16: #{mlp_forward.1} parent=0 // pred_region
    _
  $region17: #{mlp_forward.1} parent=0 // pred_fallthru
    _
  // Predicated region
  $region18: #{mlp_forward.1} parent=0 // pred_check
    _
  $region19: #{mlp_forward.1} parent=0 // pred_check_branch
    %21 = sbr.rel (0) target = $region21
  $region20: #{mlp_forward.1} parent=0 // pred_region
    _
  $region21: #{mlp_forward.1} parent=0 // pred_fallthru
    _
  // Predicated region
  $region22: #{mlp_forward.1} parent=0 // pred_check
    _
  $region23: #{mlp_forward.1} parent=0 // pred_check_branch
    %23 = sbr.rel (0) target = $region25
  $region24: #{mlp_forward.1} parent=0 // pred_region
    _
  $region25: #{mlp_forward.1} parent=0 // pred_fallthru
    _
  // Predicated region
  $region26: #{mlp_forward.1} parent=0 // pred_check
    _
  $region27: #{mlp_forward.1} parent=0 // pred_check_branch
    %25 = sbr.rel (0) target = $region29
  $region28: #{mlp_forward.1} parent=0 // pred_region
    _
  $region29: #{mlp_forward.1} parent=0 // pred_fallthru
    _
  %v27 = vld [vmem:[%s0] sm:$0xff]
  %v28 = vld [vmem:[%s0 + $0x8] sm:$0xff]
  %v29 = vld [vmem:[%s0 + $0x10] sm:$0xff]
  %v30 = vld [vmem:[%s0 + $0x18] sm:$0xf]
  %v31 = vld [vmem:[%s0 + $0x1c] sm:$0xff]
  %v32 = vld [vmem:[%s0 + $0x24] sm:$0xff]
  %v33 = vld [vmem:[%s0 + $0x2c] sm:$0xff]
  %v34 = vld [vmem:[%s0 + $0x34] sm:$0xf]
  %v35 = vld [vmem:[%s1] sm:$0xff]
  %v36 = vld [vmem:[%s1 + $0x8] sm:$0xf]
  %v37 = vld [vmem:[%s1 + $0xc] sm:$0xff]
  %v38 = vld [vmem:[%s1 + $0x14] sm:$0xf]
  %v39 = vld [vmem:[%s1 + $0x18] sm:$0xff]
  %v40 = vld [vmem:[%s1 + $0x20] sm:$0xf]
  %v41 = vld [vmem:[%s1 + $0x24] sm:$0xff]
  %v42 = vld [vmem:[%s1 + $0x2c] sm:$0xf]
  %v43 = vld [vmem:[%s1 + $0x30] sm:$0xff]
  %v44 = vld [vmem:[%s1 + $0x38] sm:$0xf]
  %v45 = vld [vmem:[%s1 + $0x3c] sm:$0xff]
  %v46 = vld [vmem:[%s1 + $0x44] sm:$0xf]
  %v47 = vld [vmem:[%s1 + $0x48] sm:$0xff]
  %v48 = vld [vmem:[%s1 + $0x50] sm:$0xf]
  %v49 = vld [vmem:[%s1 + $0x54] sm:$0xff]
  %v50 = vld [vmem:[%s1 + $0x5c] sm:$0xf]
  %v51 = vld [vmem:[%s1 + $0x60] sm:$0xff]
  %v52 = vld [vmem:[%s1 + $0x68] sm:$0xf]
  %v53 = vld [vmem:[%s1 + $0x6c] sm:$0xff]
  %v54 = vld [vmem:[%s1 + $0x74] sm:$0xf]
  %v55 = vld [vmem:[%s1 + $0x78] sm:$0xff]
  %v56 = vld [vmem:[%s1 + $0x80] sm:$0xf]
  %v57 = vld [vmem:[%s1 + $0x84] sm:$0xff]
  %v58 = vld [vmem:[%s1 + $0x8c] sm:$0xf]
  %v59 = vld [vmem:[%s1 + $0x90] sm:$0xff]
  %v60 = vld [vmem:[%s1 + $0x98] sm:$0xf]
  %v61 = vld [vmem:[%s1 + $0x9c] sm:$0xff]
  %v62 = vld [vmem:[%s1 + $0xa4] sm:$0xf]
  %v63 = vld [vmem:[%s1 + $0xa8] sm:$0xff]
  %v64 = vld [vmem:[%s1 + $0xb0] sm:$0xf]
  %v65 = vld [vmem:[%s1 + $0xb4] sm:$0xff]
  %v66 = vld [vmem:[%s1 + $0xbc] sm:$0xf]
  %v67 = vld [vmem:[%s1 + $0xc0] sm:$0xff]
  %v68 = vld [vmem:[%s1 + $0xc8] sm:$0xf]
  %v69 = vld [vmem:[%s1 + $0xcc] sm:$0xff]
  %v70 = vld [vmem:[%s1 + $0xd4] sm:$0xf]
  %v71 = vld [vmem:[%s1 + $0xd8] sm:$0xff]
  %v72 = vld [vmem:[%s1 + $0xe0] sm:$0xf]
  %v73 = vld [vmem:[%s1 + $0xe4] sm:$0xff]
  %v74 = vld [vmem:[%s1 + $0xec] sm:$0xf]
  %v75 = vld [vmem:[%s1 + $0xf0] sm:$0xff]
  %v76 = vld [vmem:[%s1 + $0xf8] sm:$0xf]
  %v77 = vld [vmem:[%s1 + $0xfc] sm:$0xff]
  %v78 = vld [vmem:[%s1 + $0x104] sm:$0xf]
  %v79 = vld [vmem:[%s1 + $0x108] sm:$0xff]
  %v80 = vld [vmem:[%s1 + $0x110] sm:$0xf]
  %v81 = vld [vmem:[%s1 + $0x114] sm:$0xff]
  %v82 = vld [vmem:[%s1 + $0x11c] sm:$0xf]
  %v83 = vld [vmem:[%s1 + $0x120] sm:$0xff]
  %v84 = vld [vmem:[%s1 + $0x128] sm:$0xf]
  %v85 = vld [vmem:[%s1 + $0x12c] sm:$0xff]
  %v86 = vld [vmem:[%s1 + $0x134] sm:$0xf]
  %v87 = vld [vmem:[%s1 + $0x138] sm:$0xff]
  %v88 = vld [vmem:[%s1 + $0x140] sm:$0xf]
  %v89 = vld [vmem:[%s1 + $0x144] sm:$0xff]
  %v90 = vld [vmem:[%s1 + $0x14c] sm:$0xf]
  %v91 = vld [vmem:[%s1 + $0x150] sm:$0xff]
  %v92 = vld [vmem:[%s1 + $0x158] sm:$0xf]
  %v93 = vld [vmem:[%s1 + $0x15c] sm:$0xff]
  %v94 = vld [vmem:[%s1 + $0x164] sm:$0xf]
  %v95 = vld [vmem:[%s1 + $0x168] sm:$0xff]
  %v96 = vld [vmem:[%s1 + $0x170] sm:$0xf]
  %v97 = vld [vmem:[%s1 + $0x174] sm:$0xff]
  %v98 = vld [vmem:[%s1 + $0x17c] sm:$0xf]
  %v99 = vld [vmem:[%s1 + $0x180] sm:$0xff]
  %v100 = vld [vmem:[%s1 + $0x188] sm:$0xf]
  %v101 = vld [vmem:[%s1 + $0x18c] sm:$0xff]
  %v102 = vld [vmem:[%s1 + $0x194] sm:$0xf]
  %v103 = vld [vmem:[%s1 + $0x198] sm:$0xff]
  %v104 = vld [vmem:[%s1 + $0x1a0] sm:$0xf]
  %v105 = vld [vmem:[%s1 + $0x1a4] sm:$0xff]
  %v106 = vld [vmem:[%s1 + $0x1ac] sm:$0xf]
  %v107 = vld [vmem:[%s1 + $0x1b0] sm:$0xff]
  %v108 = vld [vmem:[%s1 + $0x1b8] sm:$0xf]
  %v109 = vld [vmem:[%s1 + $0x1bc] sm:$0xff]
  %v110 = vld [vmem:[%s1 + $0x1c4] sm:$0xf]
  %v111 = vld [vmem:[%s1 + $0x1c8] sm:$0xff]
  %v112 = vld [vmem:[%s1 + $0x1d0] sm:$0xf]
  %v113 = vld [vmem:[%s1 + $0x1d4] sm:$0xff]
  %v114 = vld [vmem:[%s1 + $0x1dc] sm:$0xf]
  %v115 = vld [vmem:[%s1 + $0x1e0] sm:$0xff]
  %v116 = vld [vmem:[%s1 + $0x1e8] sm:$0xf]
  %v117 = vld [vmem:[%s1 + $0x1ec] sm:$0xff]
  %v118 = vld [vmem:[%s1 + $0x1f4] sm:$0xf]
  %v119 = vld [vmem:[%s1 + $0x1f8] sm:$0xff]
  %v120 = vld [vmem:[%s1 + $0x200] sm:$0xf]
  %v121 = vld [vmem:[%s1 + $0x204] sm:$0xff]
  %v122 = vld [vmem:[%s1 + $0x20c] sm:$0xf]
  %v123 = vld [vmem:[%s1 + $0x210] sm:$0xff]
  %v124 = vld [vmem:[%s1 + $0x218] sm:$0xf]
  %v125 = vld [vmem:[%s1 + $0x21c] sm:$0xff]
  %v126 = vld [vmem:[%s1 + $0x224] sm:$0xf]
  %v127 = vld [vmem:[%s1 + $0x228] sm:$0xff]
  %v128 = vld [vmem:[%s1 + $0x230] sm:$0xf]
  %v129 = vld [vmem:[%s1 + $0x234] sm:$0xff]
  %v130 = vld [vmem:[%s1 + $0x23c] sm:$0xf]
  %v131 = vld [vmem:[%s1 + $0x240] sm:$0xff]
  %v132 = vld [vmem:[%s1 + $0x248] sm:$0xf]
  %v133 = vld [vmem:[%s1 + $0x24c] sm:$0xff]
  %v134 = vld [vmem:[%s1 + $0x254] sm:$0xf]
  %v135 = vld [vmem:[%s1 + $0x258] sm:$0xff]
  %v136 = vld [vmem:[%s1 + $0x260] sm:$0xf]
  %v137 = vld [vmem:[%s1 + $0x264] sm:$0xff]
  %v138 = vld [vmem:[%s1 + $0x26c] sm:$0xf]
  %v139 = vld [vmem:[%s1 + $0x270] sm:$0xff]
  %v140 = vld [vmem:[%s1 + $0x278] sm:$0xf]
  %v141 = vld [vmem:[%s1 + $0x27c] sm:$0xff]
  %v142 = vld [vmem:[%s1 + $0x284] sm:$0xf]
  %v143 = vld [vmem:[%s1 + $0x288] sm:$0xff]
  %v144 = vld [vmem:[%s1 + $0x290] sm:$0xf]
  %v145 = vld [vmem:[%s1 + $0x294] sm:$0xff]
  %v146 = vld [vmem:[%s1 + $0x29c] sm:$0xf]
  %v147 = vld [vmem:[%s1 + $0x2a0] sm:$0xff]
  %v148 = vld [vmem:[%s1 + $0x2a8] sm:$0xf]
  %v149 = vld [vmem:[%s1 + $0x2ac] sm:$0xff]
  %v150 = vld [vmem:[%s1 + $0x2b4] sm:$0xf]
  %v151 = vld [vmem:[%s1 + $0x2b8] sm:$0xff]
  %v152 = vld [vmem:[%s1 + $0x2c0] sm:$0xf]
  %v153 = vld [vmem:[%s1 + $0x2c4] sm:$0xff]
  %v154 = vld [vmem:[%s1 + $0x2cc] sm:$0xf]
  %v155 = vld [vmem:[%s1 + $0x2d0] sm:$0xff]
  %v156 = vld [vmem:[%s1 + $0x2d8] sm:$0xf]
  %v157 = vld [vmem:[%s1 + $0x2dc] sm:$0xff]
  %v158 = vld [vmem:[%s1 + $0x2e4] sm:$0xf]
  %v159 = vld [vmem:[%s1 + $0x2e8] sm:$0xff]
  %v160 = vld [vmem:[%s1 + $0x2f0] sm:$0xf]
  %v161 = vld [vmem:[%s1 + $0x2f4] sm:$0xff]
  %v162 = vld [vmem:[%s1 + $0x2fc] sm:$0xf]
  %v163 = vld [vmem:[%s1 + $0x300] sm:$0xff]
  %v164 = vld [vmem:[%s1 + $0x308] sm:$0xf]
  %v165 = vld [vmem:[%s1 + $0x30c] sm:$0xff]
  %v166 = vld [vmem:[%s1 + $0x314] sm:$0xf]
  %v167 = vld [vmem:[%s1 + $0x318] sm:$0xff]
  %v168 = vld [vmem:[%s1 + $0x320] sm:$0xf]
  %v169 = vld [vmem:[%s1 + $0x324] sm:$0xff]
  %v170 = vld [vmem:[%s1 + $0x32c] sm:$0xf]
  %v171 = vld [vmem:[%s1 + $0x330] sm:$0xff]
  %v172 = vld [vmem:[%s1 + $0x338] sm:$0xf]
  %v173 = vld [vmem:[%s1 + $0x33c] sm:$0xff]
  %v174 = vld [vmem:[%s1 + $0x344] sm:$0xf]
  %v175 = vld [vmem:[%s1 + $0x348] sm:$0xff]
  %v176 = vld [vmem:[%s1 + $0x350] sm:$0xf]
  %v177 = vld [vmem:[%s1 + $0x354] sm:$0xff]
  %v178 = vld [vmem:[%s1 + $0x35c] sm:$0xf]
  %v179 = vld [vmem:[%s1 + $0x360] sm:$0xff]
  %v180 = vld [vmem:[%s1 + $0x368] sm:$0xf]
  %v181 = vld [vmem:[%s1 + $0x36c] sm:$0xff]
  %v182 = vld [vmem:[%s1 + $0x374] sm:$0xf]
  %v183 = vld [vmem:[%s1 + $0x378] sm:$0xff]
  %v184 = vld [vmem:[%s1 + $0x380] sm:$0xf]
  %v185 = vld [vmem:[%s1 + $0x384] sm:$0xff]
  %v186 = vld [vmem:[%s1 + $0x38c] sm:$0xf]
  %v187 = vld [vmem:[%s1 + $0x390] sm:$0xff]
  %v188 = vld [vmem:[%s1 + $0x398] sm:$0xf]
  %v189 = vld [vmem:[%s1 + $0x39c] sm:$0xff]
  %v190 = vld [vmem:[%s1 + $0x3a4] sm:$0xf]
  %v191 = vld [vmem:[%s1 + $0x3a8] sm:$0xff]
  %v192 = vld [vmem:[%s1 + $0x3b0] sm:$0xf]
  %v193 = vld [vmem:[%s1 + $0x3b4] sm:$0xff]
  %v194 = vld [vmem:[%s1 + $0x3bc] sm:$0xf]
  %v195 = vld [vmem:[%s1 + $0x3c0] sm:$0xff]
  %v196 = vld [vmem:[%s1 + $0x3c8] sm:$0xf]
  %v197 = vld [vmem:[%s1 + $0x3cc] sm:$0xff]
  %v198 = vld [vmem:[%s1 + $0x3d4] sm:$0xf]
  %v199 = vld [vmem:[%s1 + $0x3d8] sm:$0xff]
  %v200 = vld [vmem:[%s1 + $0x3e0] sm:$0xf]
  %v201 = vld [vmem:[%s1 + $0x3e4] sm:$0xff]
  %v202 = vld [vmem:[%s1 + $0x3ec] sm:$0xf]
  %v203 = vld [vmem:[%s1 + $0x3f0] sm:$0xff]
  %v204 = vld [vmem:[%s1 + $0x3f8] sm:$0xf]
  %v205 = vld [vmem:[%s1 + $0x3fc] sm:$0xff]
  %v206 = vld [vmem:[%s1 + $0x404] sm:$0xf]
  %v207 = vld [vmem:[%s1 + $0x408] sm:$0xff]
  %v208 = vld [vmem:[%s1 + $0x410] sm:$0xf]
  %v209 = vld [vmem:[%s1 + $0x414] sm:$0xff]
  %v210 = vld [vmem:[%s1 + $0x41c] sm:$0xf]
  %v211 = vld [vmem:[%s1 + $0x420] sm:$0xff]
  %v212 = vld [vmem:[%s1 + $0x428] sm:$0xf]
  %v213 = vld [vmem:[%s1 + $0x42c] sm:$0xff]
  %v214 = vld [vmem:[%s1 + $0x434] sm:$0xf]
  %v215 = vld [vmem:[%s1 + $0x438] sm:$0xff]
  %v216 = vld [vmem:[%s1 + $0x440] sm:$0xf]
  %v217 = vld [vmem:[%s1 + $0x444] sm:$0xff]
  %v218 = vld [vmem:[%s1 + $0x44c] sm:$0xf]
  %v219 = vld [vmem:[%s1 + $0x450] sm:$0xff]
  %v220 = vld [vmem:[%s1 + $0x458] sm:$0xf]
  %v221 = vld [vmem:[%s1 + $0x45c] sm:$0xff]
  %v222 = vld [vmem:[%s1 + $0x464] sm:$0xf]
  %v223 = vld [vmem:[%s1 + $0x468] sm:$0xff]
  %v224 = vld [vmem:[%s1 + $0x470] sm:$0xf]
  %v225 = vld [vmem:[%s1 + $0x474] sm:$0xff]
  %v226 = vld [vmem:[%s1 + $0x47c] sm:$0xf]
  %v227 = vld [vmem:[%s1 + $0x480] sm:$0xff]
  %v228 = vld [vmem:[%s1 + $0x488] sm:$0xf]
  %v229 = vld [vmem:[%s1 + $0x48c] sm:$0xff]
  %v230 = vld [vmem:[%s1 + $0x494] sm:$0xf]
  %v231 = vld [vmem:[%s2] sm:$0x7]
  %v233 = vlaneseq
  %v234 = vshrl.u32 %v233, 7
  %v235 = vsub.s32 0, %v234
  %v236 = vrot.slane %v231, %v235
  %v237 = vlaneseq
  %v238 = vshrl.u32 %v237, 7
  %v239 = vsub.s32 1, %v238
  %v240 = vrot.slane %v231, %v239
  %v241 = vlaneseq
  %v242 = vshrl.u32 %v241, 7
  %v243 = vsub.s32 2, %v242
  %v244 = vrot.slane %v231, %v243
  %v256 = vunpack.c.l.b16 %v27
  %v257 = vunpack.c.h.b16 %v27
  %v258 = vunpack.c.l.b16 %v28
  %v259 = vunpack.c.h.b16 %v28
  %v260 = vunpack.c.l.b16 %v29
  %v261 = vunpack.c.h.b16 %v29
  %v262 = vunpack.c.l.b16 %v30
  %v263 = vunpack.c.l.b16 %v31
  %v264 = vunpack.c.h.b16 %v31
  %v265 = vunpack.c.l.b16 %v32
  %v266 = vunpack.c.h.b16 %v32
  %v267 = vunpack.c.l.b16 %v33
  %v268 = vunpack.c.h.b16 %v33
  %v269 = vunpack.c.l.b16 %v34
  %v270 = vpack.c.b16 %v263, %v256
  %v271 = vpack.c.b16 %v264, %v257
  %v272 = vpack.c.b16 %v265, %v258
  %v273 = vpack.c.b16 %v266, %v259
  %v274 = vpack.c.b16 %v267, %v260
  %v275 = vpack.c.b16 %v268, %v261
  %v276 = vpack.c.b16 %v269, %v262
  %v479 = vunpack.c.l.b16 %v35
  %v480 = vunpack.c.h.b16 %v35
  %v481 = vunpack.c.l.b16 %v36
  %v482 = vunpack.c.l.b16 %v37
  %v483 = vunpack.c.h.b16 %v37
  %v484 = vunpack.c.l.b16 %v38
  %v485 = vunpack.c.l.b16 %v39
  %v486 = vunpack.c.h.b16 %v39
  %v487 = vunpack.c.l.b16 %v40
  %v488 = vunpack.c.l.b16 %v41
  %v489 = vunpack.c.h.b16 %v41
  %v490 = vunpack.c.l.b16 %v42
  %v491 = vunpack.c.l.b16 %v43
  %v492 = vunpack.c.h.b16 %v43
  %v493 = vunpack.c.l.b16 %v44
  %v494 = vunpack.c.l.b16 %v45
  %v495 = vunpack.c.h.b16 %v45
  %v496 = vunpack.c.l.b16 %v46
  %v497 = vunpack.c.l.b16 %v47
  %v498 = vunpack.c.h.b16 %v47
  %v499 = vunpack.c.l.b16 %v48
  %v500 = vunpack.c.l.b16 %v49
  %v501 = vunpack.c.h.b16 %v49
  %v502 = vunpack.c.l.b16 %v50
  %v503 = vunpack.c.l.b16 %v51
  %v504 = vunpack.c.h.b16 %v51
  %v505 = vunpack.c.l.b16 %v52
  %v506 = vunpack.c.l.b16 %v53
  %v507 = vunpack.c.h.b16 %v53
  %v508 = vunpack.c.l.b16 %v54
  %v509 = vunpack.c.l.b16 %v55
  %v510 = vunpack.c.h.b16 %v55
  %v511 = vunpack.c.l.b16 %v56
  %v512 = vunpack.c.l.b16 %v57
  %v513 = vunpack.c.h.b16 %v57
  %v514 = vunpack.c.l.b16 %v58
  %v515 = vunpack.c.l.b16 %v59
  %v516 = vunpack.c.h.b16 %v59
  %v517 = vunpack.c.l.b16 %v60
  %v518 = vunpack.c.l.b16 %v61
  %v519 = vunpack.c.h.b16 %v61
  %v520 = vunpack.c.l.b16 %v62
  %v521 = vunpack.c.l.b16 %v63
  %v522 = vunpack.c.h.b16 %v63
  %v523 = vunpack.c.l.b16 %v64
  %v524 = vunpack.c.l.b16 %v65
  %v525 = vunpack.c.h.b16 %v65
  %v526 = vunpack.c.l.b16 %v66
  %v527 = vunpack.c.l.b16 %v67
  %v528 = vunpack.c.h.b16 %v67
  %v529 = vunpack.c.l.b16 %v68
  %v530 = vunpack.c.l.b16 %v69
  %v531 = vunpack.c.h.b16 %v69
  %v532 = vunpack.c.l.b16 %v70
  %v533 = vunpack.c.l.b16 %v71
  %v534 = vunpack.c.h.b16 %v71
  %v535 = vunpack.c.l.b16 %v72
  %v536 = vunpack.c.l.b16 %v73
  %v537 = vunpack.c.h.b16 %v73
  %v538 = vunpack.c.l.b16 %v74
  %v539 = vunpack.c.l.b16 %v75
  %v540 = vunpack.c.h.b16 %v75
  %v541 = vunpack.c.l.b16 %v76
  %v542 = vunpack.c.l.b16 %v77
  %v543 = vunpack.c.h.b16 %v77
  %v544 = vunpack.c.l.b16 %v78
  %v545 = vunpack.c.l.b16 %v79
  %v546 = vunpack.c.h.b16 %v79
  %v547 = vunpack.c.l.b16 %v80
  %v548 = vunpack.c.l.b16 %v81
  %v549 = vunpack.c.h.b16 %v81
  %v550 = vunpack.c.l.b16 %v82
  %v551 = vunpack.c.l.b16 %v83
  %v552 = vunpack.c.h.b16 %v83
  %v553 = vunpack.c.l.b16 %v84
  %v554 = vunpack.c.l.b16 %v85
  %v555 = vunpack.c.h.b16 %v85
  %v556 = vunpack.c.l.b16 %v86
  %v557 = vunpack.c.l.b16 %v87
  %v558 = vunpack.c.h.b16 %v87
  %v559 = vunpack.c.l.b16 %v88
  %v560 = vunpack.c.l.b16 %v89
  %v561 = vunpack.c.h.b16 %v89
  %v562 = vunpack.c.l.b16 %v90
  %v563 = vunpack.c.l.b16 %v91
  %v564 = vunpack.c.h.b16 %v91
  %v565 = vunpack.c.l.b16 %v92
  %v566 = vunpack.c.l.b16 %v93
  %v567 = vunpack.c.h.b16 %v93
  %v568 = vunpack.c.l.b16 %v94
  %v569 = vunpack.c.l.b16 %v95
  %v570 = vunpack.c.h.b16 %v95
  %v571 = vunpack.c.l.b16 %v96
  %v572 = vunpack.c.l.b16 %v97
  %v573 = vunpack.c.h.b16 %v97
  %v574 = vunpack.c.l.b16 %v98
  %v575 = vunpack.c.l.b16 %v99
  %v576 = vunpack.c.h.b16 %v99
  %v577 = vunpack.c.l.b16 %v100
  %v578 = vunpack.c.l.b16 %v101
  %v579 = vunpack.c.h.b16 %v101
  %v580 = vunpack.c.l.b16 %v102
  %v581 = vunpack.c.l.b16 %v103
  %v582 = vunpack.c.h.b16 %v103
  %v583 = vunpack.c.l.b16 %v104
  %v584 = vunpack.c.l.b16 %v105
  %v585 = vunpack.c.h.b16 %v105
  %v586 = vunpack.c.l.b16 %v106
  %v587 = vunpack.c.l.b16 %v107
  %v588 = vunpack.c.h.b16 %v107
  %v589 = vunpack.c.l.b16 %v108
  %v590 = vunpack.c.l.b16 %v109
  %v591 = vunpack.c.h.b16 %v109
  %v592 = vunpack.c.l.b16 %v110
  %v593 = vunpack.c.l.b16 %v111
  %v594 = vunpack.c.h.b16 %v111
  %v595 = vunpack.c.l.b16 %v112
  %v596 = vunpack.c.l.b16 %v113
  %v597 = vunpack.c.h.b16 %v113
  %v598 = vunpack.c.l.b16 %v114
  %v599 = vunpack.c.l.b16 %v115
  %v600 = vunpack.c.h.b16 %v115
  %v601 = vunpack.c.l.b16 %v116
  %v602 = vunpack.c.l.b16 %v117
  %v603 = vunpack.c.h.b16 %v117
  %v604 = vunpack.c.l.b16 %v118
  %v605 = vunpack.c.l.b16 %v119
  %v606 = vunpack.c.h.b16 %v119
  %v607 = vunpack.c.l.b16 %v120
  %v608 = vunpack.c.l.b16 %v121
  %v609 = vunpack.c.h.b16 %v121
  %v610 = vunpack.c.l.b16 %v122
  %v611 = vunpack.c.l.b16 %v123
  %v612 = vunpack.c.h.b16 %v123
  %v613 = vunpack.c.l.b16 %v124
  %v614 = vunpack.c.l.b16 %v125
  %v615 = vunpack.c.h.b16 %v125
  %v616 = vunpack.c.l.b16 %v126
  %v617 = vunpack.c.l.b16 %v127
  %v618 = vunpack.c.h.b16 %v127
  %v619 = vunpack.c.l.b16 %v128
  %v620 = vunpack.c.l.b16 %v129
  %v621 = vunpack.c.h.b16 %v129
  %v622 = vunpack.c.l.b16 %v130
  %v623 = vunpack.c.l.b16 %v131
  %v624 = vunpack.c.h.b16 %v131
  %v625 = vunpack.c.l.b16 %v132
  %v626 = vunpack.c.l.b16 %v133
  %v627 = vunpack.c.h.b16 %v133
  %v628 = vunpack.c.l.b16 %v134
  %v629 = vunpack.c.l.b16 %v135
  %v630 = vunpack.c.h.b16 %v135
  %v631 = vunpack.c.l.b16 %v136
  %v632 = vunpack.c.l.b16 %v137
  %v633 = vunpack.c.h.b16 %v137
  %v634 = vunpack.c.l.b16 %v138
  %v635 = vunpack.c.l.b16 %v139
  %v636 = vunpack.c.h.b16 %v139
  %v637 = vunpack.c.l.b16 %v140
  %v638 = vunpack.c.l.b16 %v141
  %v639 = vunpack.c.h.b16 %v141
  %v640 = vunpack.c.l.b16 %v142
  %v641 = vunpack.c.l.b16 %v143
  %v642 = vunpack.c.h.b16 %v143
  %v643 = vunpack.c.l.b16 %v144
  %v644 = vunpack.c.l.b16 %v145
  %v645 = vunpack.c.h.b16 %v145
  %v646 = vunpack.c.l.b16 %v146
  %v647 = vunpack.c.l.b16 %v147
  %v648 = vunpack.c.h.b16 %v147
  %v649 = vunpack.c.l.b16 %v148
  %v650 = vunpack.c.l.b16 %v149
  %v651 = vunpack.c.h.b16 %v149
  %v652 = vunpack.c.l.b16 %v150
  %v653 = vunpack.c.l.b16 %v151
  %v654 = vunpack.c.h.b16 %v151
  %v655 = vunpack.c.l.b16 %v152
  %v656 = vunpack.c.l.b16 %v153
  %v657 = vunpack.c.h.b16 %v153
  %v658 = vunpack.c.l.b16 %v154
  %v659 = vunpack.c.l.b16 %v155
  %v660 = vunpack.c.h.b16 %v155
  %v661 = vunpack.c.l.b16 %v156
  %v662 = vunpack.c.l.b16 %v157
  %v663 = vunpack.c.h.b16 %v157
  %v664 = vunpack.c.l.b16 %v158
  %v665 = vunpack.c.l.b16 %v159
  %v666 = vunpack.c.h.b16 %v159
  %v667 = vunpack.c.l.b16 %v160
  %v668 = vunpack.c.l.b16 %v161
  %v669 = vunpack.c.h.b16 %v161
  %v670 = vunpack.c.l.b16 %v162
  %v671 = vunpack.c.l.b16 %v163
  %v672 = vunpack.c.h.b16 %v163
  %v673 = vunpack.c.l.b16 %v164
  %v674 = vunpack.c.l.b16 %v165
  %v675 = vunpack.c.h.b16 %v165
  %v676 = vunpack.c.l.b16 %v166
  %v677 = vunpack.c.l.b16 %v167
  %v678 = vunpack.c.h.b16 %v167
  %v679 = vunpack.c.l.b16 %v168
  %v680 = vunpack.c.l.b16 %v169
  %v681 = vunpack.c.h.b16 %v169
  %v682 = vunpack.c.l.b16 %v170
  %v683 = vunpack.c.l.b16 %v171
  %v684 = vunpack.c.h.b16 %v171
  %v685 = vunpack.c.l.b16 %v172
  %v686 = vunpack.c.l.b16 %v173
  %v687 = vunpack.c.h.b16 %v173
  %v688 = vunpack.c.l.b16 %v174
  %v689 = vunpack.c.l.b16 %v175
  %v690 = vunpack.c.h.b16 %v175
  %v691 = vunpack.c.l.b16 %v176
  %v692 = vunpack.c.l.b16 %v177
  %v693 = vunpack.c.h.b16 %v177
  %v694 = vunpack.c.l.b16 %v178
  %v695 = vunpack.c.l.b16 %v179
  %v696 = vunpack.c.h.b16 %v179
  %v697 = vunpack.c.l.b16 %v180
  %v698 = vunpack.c.l.b16 %v181
  %v699 = vunpack.c.h.b16 %v181
  %v700 = vunpack.c.l.b16 %v182
  %v701 = vunpack.c.l.b16 %v183
  %v702 = vunpack.c.h.b16 %v183
  %v703 = vunpack.c.l.b16 %v184
  %v704 = vunpack.c.l.b16 %v185
  %v705 = vunpack.c.h.b16 %v185
  %v706 = vunpack.c.l.b16 %v186
  %v707 = vunpack.c.l.b16 %v187
  %v708 = vunpack.c.h.b16 %v187
  %v709 = vunpack.c.l.b16 %v188
  %v710 = vunpack.c.l.b16 %v189
  %v711 = vunpack.c.h.b16 %v189
  %v712 = vunpack.c.l.b16 %v190
  %v713 = vunpack.c.l.b16 %v191
  %v714 = vunpack.c.h.b16 %v191
  %v715 = vunpack.c.l.b16 %v192
  %v716 = vunpack.c.l.b16 %v193
  %v717 = vunpack.c.h.b16 %v193
  %v718 = vunpack.c.l.b16 %v194
  %v719 = vunpack.c.l.b16 %v195
  %v720 = vunpack.c.h.b16 %v195
  %v721 = vunpack.c.l.b16 %v196
  %v722 = vunpack.c.l.b16 %v197
  %v723 = vunpack.c.h.b16 %v197
  %v724 = vunpack.c.l.b16 %v198
  %v725 = vunpack.c.l.b16 %v199
  %v726 = vunpack.c.h.b16 %v199
  %v727 = vunpack.c.l.b16 %v200
  %v728 = vunpack.c.l.b16 %v201
  %v729 = vunpack.c.h.b16 %v201
  %v730 = vunpack.c.l.b16 %v202
  %v731 = vunpack.c.l.b16 %v203
  %v732 = vunpack.c.h.b16 %v203
  %v733 = vunpack.c.l.b16 %v204
  %v734 = vunpack.c.l.b16 %v205
  %v735 = vunpack.c.h.b16 %v205
  %v736 = vunpack.c.l.b16 %v206
  %v737 = vunpack.c.l.b16 %v207
  %v738 = vunpack.c.h.b16 %v207
  %v739 = vunpack.c.l.b16 %v208
  %v740 = vunpack.c.l.b16 %v209
  %v741 = vunpack.c.h.b16 %v209
  %v742 = vunpack.c.l.b16 %v210
  %v743 = vunpack.c.l.b16 %v211
  %v744 = vunpack.c.h.b16 %v211
  %v745 = vunpack.c.l.b16 %v212
  %v746 = vunpack.c.l.b16 %v213
  %v747 = vunpack.c.h.b16 %v213
  %v748 = vunpack.c.l.b16 %v214
  %v749 = vunpack.c.l.b16 %v215
  %v750 = vunpack.c.h.b16 %v215
  %v751 = vunpack.c.l.b16 %v216
  %v752 = vunpack.c.l.b16 %v217
  %v753 = vunpack.c.h.b16 %v217
  %v754 = vunpack.c.l.b16 %v218
  %v755 = vunpack.c.l.b16 %v219
  %v756 = vunpack.c.h.b16 %v219
  %v757 = vunpack.c.l.b16 %v220
  %v758 = vunpack.c.l.b16 %v221
  %v759 = vunpack.c.h.b16 %v221
  %v760 = vunpack.c.l.b16 %v222
  %v761 = vunpack.c.l.b16 %v223
  %v762 = vunpack.c.h.b16 %v223
  %v763 = vunpack.c.l.b16 %v224
  %v764 = vunpack.c.l.b16 %v225
  %v765 = vunpack.c.h.b16 %v225
  %v766 = vunpack.c.l.b16 %v226
  %v767 = vunpack.c.l.b16 %v227
  %v768 = vunpack.c.h.b16 %v227
  %v769 = vunpack.c.l.b16 %v228
  %v770 = vunpack.c.l.b16 %v229
  %v771 = vunpack.c.h.b16 %v229
  %v772 = vunpack.c.l.b16 %v230
  %v773 = vpack.c.b16 %v482, %v479
  %v774 = vpack.c.b16 %v483, %v480
  %v775 = vpack.c.b16 %v484, %v481
  %v776 = vpack.c.b16 %v488, %v485
  %v777 = vpack.c.b16 %v489, %v486
  %v778 = vpack.c.b16 %v490, %v487
  %v779 = vpack.c.b16 %v494, %v491
  %v780 = vpack.c.b16 %v495, %v492
  %v781 = vpack.c.b16 %v496, %v493
  %v782 = vpack.c.b16 %v500, %v497
  %v783 = vpack.c.b16 %v501, %v498
  %v784 = vpack.c.b16 %v502, %v499
  %v785 = vpack.c.b16 %v506, %v503
  %v786 = vpack.c.b16 %v507, %v504
  %v787 = vpack.c.b16 %v508, %v505
  %v788 = vpack.c.b16 %v512, %v509
  %v789 = vpack.c.b16 %v513, %v510
  %v790 = vpack.c.b16 %v514, %v511
  %v791 = vpack.c.b16 %v518, %v515
  %v792 = vpack.c.b16 %v519, %v516
  %v793 = vpack.c.b16 %v520, %v517
  %v794 = vpack.c.b16 %v524, %v521
  %v795 = vpack.c.b16 %v525, %v522
  %v796 = vpack.c.b16 %v526, %v523
  %v797 = vpack.c.b16 %v530, %v527
  %v798 = vpack.c.b16 %v531, %v528
  %v799 = vpack.c.b16 %v532, %v529
  %v800 = vpack.c.b16 %v536, %v533
  %v801 = vpack.c.b16 %v537, %v534
  %v802 = vpack.c.b16 %v538, %v535
  %v803 = vpack.c.b16 %v542, %v539
  %v804 = vpack.c.b16 %v543, %v540
  %v805 = vpack.c.b16 %v544, %v541
  %v806 = vpack.c.b16 %v548, %v545
  %v807 = vpack.c.b16 %v549, %v546
  %v808 = vpack.c.b16 %v550, %v547
  %v809 = vpack.c.b16 %v554, %v551
  %v810 = vpack.c.b16 %v555, %v552
  %v811 = vpack.c.b16 %v556, %v553
  %v812 = vpack.c.b16 %v560, %v557
  %v813 = vpack.c.b16 %v561, %v558
  %v814 = vpack.c.b16 %v562, %v559
  %v815 = vpack.c.b16 %v566, %v563
  %v816 = vpack.c.b16 %v567, %v564
  %v817 = vpack.c.b16 %v568, %v565
  %v818 = vpack.c.b16 %v572, %v569
  %v819 = vpack.c.b16 %v573, %v570
  %v820 = vpack.c.b16 %v574, %v571
  %v821 = vpack.c.b16 %v578, %v575
  %v822 = vpack.c.b16 %v579, %v576
  %v823 = vpack.c.b16 %v580, %v577
  %v824 = vpack.c.b16 %v584, %v581
  %v825 = vpack.c.b16 %v585, %v582
  %v826 = vpack.c.b16 %v586, %v583
  %v827 = vpack.c.b16 %v590, %v587
  %v828 = vpack.c.b16 %v591, %v588
  %v829 = vpack.c.b16 %v592, %v589
  %v830 = vpack.c.b16 %v596, %v593
  %v831 = vpack.c.b16 %v597, %v594
  %v832 = vpack.c.b16 %v598, %v595
  %v833 = vpack.c.b16 %v602, %v599
  %v834 = vpack.c.b16 %v603, %v600
  %v835 = vpack.c.b16 %v604, %v601
  %v836 = vpack.c.b16 %v608, %v605
  %v837 = vpack.c.b16 %v609, %v606
  %v838 = vpack.c.b16 %v610, %v607
  %v839 = vpack.c.b16 %v614, %v611
  %v840 = vpack.c.b16 %v615, %v612
  %v841 = vpack.c.b16 %v616, %v613
  %v842 = vpack.c.b16 %v620, %v617
  %v843 = vpack.c.b16 %v621, %v618
  %v844 = vpack.c.b16 %v622, %v619
  %v845 = vpack.c.b16 %v626, %v623
  %v846 = vpack.c.b16 %v627, %v624
  %v847 = vpack.c.b16 %v628, %v625
  %v848 = vpack.c.b16 %v632, %v629
  %v849 = vpack.c.b16 %v633, %v630
  %v850 = vpack.c.b16 %v634, %v631
  %v851 = vpack.c.b16 %v638, %v635
  %v852 = vpack.c.b16 %v639, %v636
  %v853 = vpack.c.b16 %v640, %v637
  %v854 = vpack.c.b16 %v644, %v641
  %v855 = vpack.c.b16 %v645, %v642
  %v856 = vpack.c.b16 %v646, %v643
  %v857 = vpack.c.b16 %v650, %v647
  %v858 = vpack.c.b16 %v651, %v648
  %v859 = vpack.c.b16 %v652, %v649
  %v860 = vpack.c.b16 %v656, %v653
  %v861 = vpack.c.b16 %v657, %v654
  %v862 = vpack.c.b16 %v658, %v655
  %v863 = vpack.c.b16 %v662, %v659
  %v864 = vpack.c.b16 %v663, %v660
  %v865 = vpack.c.b16 %v664, %v661
  %v866 = vpack.c.b16 %v668, %v665
  %v867 = vpack.c.b16 %v669, %v666
  %v868 = vpack.c.b16 %v670, %v667
  %v869 = vpack.c.b16 %v674, %v671
  %v870 = vpack.c.b16 %v675, %v672
  %v871 = vpack.c.b16 %v676, %v673
  %v872 = vpack.c.b16 %v680, %v677
  %v873 = vpack.c.b16 %v681, %v678
  %v874 = vpack.c.b16 %v682, %v679
  %v875 = vpack.c.b16 %v686, %v683
  %v876 = vpack.c.b16 %v687, %v684
  %v877 = vpack.c.b16 %v688, %v685
  %v878 = vpack.c.b16 %v692, %v689
  %v879 = vpack.c.b16 %v693, %v690
  %v880 = vpack.c.b16 %v694, %v691
  %v881 = vpack.c.b16 %v698, %v695
  %v882 = vpack.c.b16 %v699, %v696
  %v883 = vpack.c.b16 %v700, %v697
  %v884 = vpack.c.b16 %v704, %v701
  %v885 = vpack.c.b16 %v705, %v702
  %v886 = vpack.c.b16 %v706, %v703
  %v887 = vpack.c.b16 %v710, %v707
  %v888 = vpack.c.b16 %v711, %v708
  %v889 = vpack.c.b16 %v712, %v709
  %v890 = vpack.c.b16 %v716, %v713
  %v891 = vpack.c.b16 %v717, %v714
  %v892 = vpack.c.b16 %v718, %v715
  %v893 = vpack.c.b16 %v722, %v719
  %v894 = vpack.c.b16 %v723, %v720
  %v895 = vpack.c.b16 %v724, %v721
  %v896 = vpack.c.b16 %v728, %v725
  %v897 = vpack.c.b16 %v729, %v726
  %v898 = vpack.c.b16 %v730, %v727
  %v899 = vpack.c.b16 %v734, %v731
  %v900 = vpack.c.b16 %v735, %v732
  %v901 = vpack.c.b16 %v736, %v733
  %v902 = vpack.c.b16 %v740, %v737
  %v903 = vpack.c.b16 %v741, %v738
  %v904 = vpack.c.b16 %v742, %v739
  %v905 = vpack.c.b16 %v746, %v743
  %v906 = vpack.c.b16 %v747, %v744
  %v907 = vpack.c.b16 %v748, %v745
  %v908 = vpack.c.b16 %v752, %v749
  %v909 = vpack.c.b16 %v753, %v750
  %v910 = vpack.c.b16 %v754, %v751
  %v911 = vpack.c.b16 %v758, %v755
  %v912 = vpack.c.b16 %v759, %v756
  %v913 = vpack.c.b16 %v760, %v757
  %v914 = vpack.c.b16 %v764, %v761
  %v915 = vpack.c.b16 %v765, %v762
  %v916 = vpack.c.b16 %v766, %v763
  %v917 = vpack.c.b16 %v770, %v767
  %v918 = vpack.c.b16 %v771, %v768
  %v919 = vpack.c.b16 %v772, %v769
  %vm1067 = vcmask 130048
  %v1069 = vsel %vm1067, %v276, 0
  %1071 = vmatprep.subr.bf16.mxu0 %v774
  %1072 = vmatpush1.bf16.msra.mxu0 %v773
  %1073 = vmatprep.subr.bf16.mxu0 %v777
  %1074 = vmatpush1.bf16.msra.mxu0 %v776
  %1075 = vmatprep.subr.bf16.mxu0 %v780
  %1076 = vmatpush1.bf16.msra.mxu0 %v779
  %1077 = vmatprep.subr.bf16.mxu0 %v783
  %1078 = vmatpush1.bf16.msra.mxu0 %v782
  %1079 = vmatprep.subr.bf16.mxu0 %v786
  %1080 = vmatpush1.bf16.msra.mxu0 %v785
  %1081 = vmatprep.subr.bf16.mxu0 %v789
  %1082 = vmatpush1.bf16.msra.mxu0 %v788
  %1083 = vmatprep.subr.bf16.mxu0 %v792
  %1084 = vmatpush1.bf16.msra.mxu0 %v791
  %1085 = vmatprep.subr.bf16.mxu0 %v795
  %1086 = vmatpush1.bf16.msra.mxu0 %v794
  %1087 = vmatprep.subr.bf16.mxu0 %v798
  %1088 = vmatpush1.bf16.msra.mxu0 %v797
  %1089 = vmatprep.subr.bf16.mxu0 %v801
  %1090 = vmatpush1.bf16.msra.mxu0 %v800
  %1091 = vmatprep.subr.bf16.mxu0 %v804
  %1092 = vmatpush1.bf16.msra.mxu0 %v803
  %1093 = vmatprep.subr.bf16.mxu0 %v807
  %1094 = vmatpush1.bf16.msra.mxu0 %v806
  %1095 = vmatprep.subr.bf16.mxu0 %v810
  %1096 = vmatpush1.bf16.msra.mxu0 %v809
  %1097 = vmatprep.subr.bf16.mxu0 %v813
  %1098 = vmatpush1.bf16.msra.mxu0 %v812
  %1099 = vmatprep.subr.bf16.mxu0 %v816
  %1100 = vmatpush1.bf16.msra.mxu0 %v815
  %1101 = vmatprep.subr.bf16.mxu0 %v819
  %1102 = vmatpush1.bf16.msra.mxu0 %v818
  %1103 = vmatprep.mubr.bf16.mxu0 %v271
  %1104 = vmatmul.mubr.bf16.gmra.mrb[0].mxu0 %v270
  %v1105 = vpop.f32.mrb[0].mxu0
  %v1106 = vadd.f32 %v236, %v1105
  %v1107 = vpop.f32.mrb[0].mxu0
  %v1108 = vadd.f32 %v240, %v1107
  %v1109 = vpop.f32.mrb[0].mxu0
  %v1110 = vadd.f32 %v236, %v1109
  %v1111 = vpop.f32.mrb[0].mxu0
  %v1112 = vadd.f32 %v240, %v1111
  %1113 = vdwg.mxu0
  %1114 = vmatprep.subr.bf16.mxu0 %v822
  %1115 = vmatpush1.bf16.msra.mxu0 %v821
  %1116 = vmatprep.subr.bf16.mxu0 %v825
  %1117 = vmatpush1.bf16.msra.mxu0 %v824
  %1118 = vmatprep.subr.bf16.mxu0 %v828
  %1119 = vmatpush1.bf16.msra.mxu0 %v827
  %1120 = vmatprep.subr.bf16.mxu0 %v831
  %1121 = vmatpush1.bf16.msra.mxu0 %v830
  %1122 = vmatprep.subr.bf16.mxu0 %v834
  %1123 = vmatpush1.bf16.msra.mxu0 %v833
  %1124 = vmatprep.subr.bf16.mxu0 %v837
  %1125 = vmatpush1.bf16.msra.mxu0 %v836
  %1126 = vmatprep.subr.bf16.mxu0 %v840
  %1127 = vmatpush1.bf16.msra.mxu0 %v839
  %1128 = vmatprep.subr.bf16.mxu0 %v843
  %1129 = vmatpush1.bf16.msra.mxu0 %v842
  %1130 = vmatprep.subr.bf16.mxu0 %v846
  %1131 = vmatpush1.bf16.msra.mxu0 %v845
  %1132 = vmatprep.subr.bf16.mxu0 %v849
  %1133 = vmatpush1.bf16.msra.mxu0 %v848
  %1134 = vmatprep.subr.bf16.mxu0 %v852
  %1135 = vmatpush1.bf16.msra.mxu0 %v851
  %1136 = vmatprep.subr.bf16.mxu0 %v855
  %1137 = vmatpush1.bf16.msra.mxu0 %v854
  %1138 = vmatprep.subr.bf16.mxu0 %v858
  %1139 = vmatpush1.bf16.msra.mxu0 %v857
  %1140 = vmatprep.subr.bf16.mxu0 %v861
  %1141 = vmatpush1.bf16.msra.mxu0 %v860
  %1142 = vmatprep.subr.bf16.mxu0 %v864
  %1143 = vmatpush1.bf16.msra.mxu0 %v863
  %1144 = vmatprep.subr.bf16.mxu0 %v867
  %1145 = vmatpush1.bf16.msra.mxu0 %v866
  %1146 = vmatprep.mubr.bf16.mxu0 %v273
  %1147 = vmatmul.mubr.bf16.gmra.mrb[0].mxu0 %v272
  %v1148 = vpop.f32.mrb[0].mxu0
  %v1149 = vadd.f32 %v1106, %v1148
  %v1150 = vpop.f32.mrb[0].mxu0
  %v1151 = vadd.f32 %v1108, %v1150
  %v1152 = vpop.f32.mrb[0].mxu0
  %v1153 = vadd.f32 %v1110, %v1152
  %v1154 = vpop.f32.mrb[0].mxu0
  %v1155 = vadd.f32 %v1112, %v1154
  %1156 = vdwg.mxu0
  %1157 = vmatprep.subr.bf16.mxu0 %v870
  %1158 = vmatpush1.bf16.msra.mxu0 %v869
  %1159 = vmatprep.subr.bf16.mxu0 %v873
  %1160 = vmatpush1.bf16.msra.mxu0 %v872
  %1161 = vmatprep.subr.bf16.mxu0 %v876
  %1162 = vmatpush1.bf16.msra.mxu0 %v875
  %1163 = vmatprep.subr.bf16.mxu0 %v879
  %1164 = vmatpush1.bf16.msra.mxu0 %v878
  %1165 = vmatprep.subr.bf16.mxu0 %v882
  %1166 = vmatpush1.bf16.msra.mxu0 %v881
  %1167 = vmatprep.subr.bf16.mxu0 %v885
  %1168 = vmatpush1.bf16.msra.mxu0 %v884
  %1169 = vmatprep.subr.bf16.mxu0 %v888
  %1170 = vmatpush1.bf16.msra.mxu0 %v887
  %1171 = vmatprep.subr.bf16.mxu0 %v891
  %1172 = vmatpush1.bf16.msra.mxu0 %v890
  %1173 = vmatprep.subr.bf16.mxu0 %v894
  %1174 = vmatpush1.bf16.msra.mxu0 %v893
  %1175 = vmatprep.subr.bf16.mxu0 %v897
  %1176 = vmatpush1.bf16.msra.mxu0 %v896
  %1177 = vmatprep.subr.bf16.mxu0 %v900
  %1178 = vmatpush1.bf16.msra.mxu0 %v899
  %1179 = vmatprep.subr.bf16.mxu0 %v903
  %1180 = vmatpush1.bf16.msra.mxu0 %v902
  %1181 = vmatprep.subr.bf16.mxu0 %v906
  %1182 = vmatpush1.bf16.msra.mxu0 %v905
  %1183 = vmatprep.subr.bf16.mxu0 %v909
  %1184 = vmatpush1.bf16.msra.mxu0 %v908
  %1185 = vmatprep.subr.bf16.mxu0 %v912
  %1186 = vmatpush1.bf16.msra.mxu0 %v911
  %1187 = vmatprep.subr.bf16.mxu0 %v915
  %1188 = vmatpush1.bf16.msra.mxu0 %v914
  %1189 = vmatprep.mubr.bf16.mxu0 %v275
  %1190 = vmatmul.mubr.bf16.gmra.mrb[0].mxu0 %v274
  %v1191 = vpop.f32.mrb[0].mxu0
  %v1192 = vadd.f32 %v1149, %v1191
  %v1193 = vpop.f32.mrb[0].mxu0
  %v1194 = vadd.f32 %v1151, %v1193
  %v1195 = vpop.f32.mrb[0].mxu0
  %v1196 = vadd.f32 %v1153, %v1195
  %v1197 = vpop.f32.mrb[0].mxu0
  %v1198 = vadd.f32 %v1155, %v1197
  %1199 = vdwg.mxu0
  %1200 = vmatprep.subr.bf16.mxu0 %v918
  %1201 = vmatpush1.bf16.msra.mxu0 %v917
  %1202 = vmatprep.subr.bf16.mxu0 0
  %1203 = vmatpush1.bf16.msra.mxu0 0
  %1204 = vmatprep.subr.bf16.mxu0 0
  %1205 = vmatpush1.bf16.msra.mxu0 0
  %1206 = vmatprep.subr.bf16.mxu0 0
  %1207 = vmatpush1.bf16.msra.mxu0 0
  %1208 = vmatprep.subr.bf16.mxu0 0
  %1209 = vmatpush1.bf16.msra.mxu0 0
  %1210 = vmatprep.subr.bf16.mxu0 0
  %1211 = vmatpush1.bf16.msra.mxu0 0
  %1212 = vmatprep.subr.bf16.mxu0 0
  %1213 = vmatpush1.bf16.msra.mxu0 0
  %1214 = vmatprep.subr.bf16.mxu0 0
  %1215 = vmatpush1.bf16.msra.mxu0 0
  %1216 = vmatprep.subr.bf16.mxu0 0
  %1217 = vmatpush1.bf16.msra.mxu0 0
  %1218 = vmatprep.subr.bf16.mxu0 0
  %1219 = vmatpush1.bf16.msra.mxu0 0
  %1220 = vmatprep.subr.bf16.mxu0 0
  %1221 = vmatpush1.bf16.msra.mxu0 0
  %1222 = vmatprep.subr.bf16.mxu0 0
  %1223 = vmatpush1.bf16.msra.mxu0 0
  %1224 = vmatprep.subr.bf16.mxu0 0
  %1225 = vmatpush1.bf16.msra.mxu0 0
  %1226 = vmatprep.subr.bf16.mxu0 0
  %1227 = vmatpush1.bf16.msra.mxu0 0
  %1228 = vmatprep.subr.bf16.mxu0 0
  %1229 = vmatpush1.bf16.msra.mxu0 0
  %1230 = vmatprep.subr.bf16.mxu0 0
  %1231 = vmatpush1.bf16.msra.mxu0 0
  %1232 = vmatprep.mubr.bf16.mxu0 0
  %1233 = vmatmul.mubr.bf16.gmra.mrb[0].mxu0 %v1069
  %v1234 = vpop.f32.mrb[0].mxu0
  %v1235 = vadd.f32 %v1192, %v1234
  %v1236 = vpop.f32.mrb[0].mxu0
  %v1237 = vadd.f32 %v1194, %v1236
  %v1238 = vpop.f32.mrb[0].mxu0
  %v1239 = vadd.f32 %v1196, %v1238
  %v1240 = vpop.f32.mrb[0].mxu0
  %v1241 = vadd.f32 %v1198, %v1240
  %1242 = vdwg.mxu0
  %1243 = vmatprep.subr.bf16.mxu0 0
  %1244 = vmatpush1.bf16.msra.mxu0 %v775
  %1245 = vmatprep.subr.bf16.mxu0 0
  %1246 = vmatpush1.bf16.msra.mxu0 %v778
  %1247 = vmatprep.subr.bf16.mxu0 0
  %1248 = vmatpush1.bf16.msra.mxu0 %v781
  %1249 = vmatprep.subr.bf16.mxu0 0
  %1250 = vmatpush1.bf16.msra.mxu0 %v784
  %1251 = vmatprep.subr.bf16.mxu0 0
  %1252 = vmatpush1.bf16.msra.mxu0 %v787
  %1253 = vmatprep.subr.bf16.mxu0 0
  %1254 = vmatpush1.bf16.msra.mxu0 %v790
  %1255 = vmatprep.subr.bf16.mxu0 0
  %1256 = vmatpush1.bf16.msra.mxu0 %v793
  %1257 = vmatprep.subr.bf16.mxu0 0
  %1258 = vmatpush1.bf16.msra.mxu0 %v796
  %1259 = vmatprep.subr.bf16.mxu0 0
  %1260 = vmatpush1.bf16.msra.mxu0 %v799
  %1261 = vmatprep.subr.bf16.mxu0 0
  %1262 = vmatpush1.bf16.msra.mxu0 %v802
  %1263 = vmatprep.subr.bf16.mxu0 0
  %1264 = vmatpush1.bf16.msra.mxu0 %v805
  %1265 = vmatprep.subr.bf16.mxu0 0
  %1266 = vmatpush1.bf16.msra.mxu0 %v808
  %1267 = vmatprep.subr.bf16.mxu0 0
  %1268 = vmatpush1.bf16.msra.mxu0 %v811
  %1269 = vmatprep.subr.bf16.mxu0 0
  %1270 = vmatpush1.bf16.msra.mxu0 %v814
  %1271 = vmatprep.subr.bf16.mxu0 0
  %1272 = vmatpush1.bf16.msra.mxu0 %v817
  %1273 = vmatprep.subr.bf16.mxu0 0
  %1274 = vmatpush1.bf16.msra.mxu0 %v820
  %1275 = vmatprep.mubr.bf16.mxu0 %v271
  %1276 = vmatmul.mubr.bf16.gmra.mrb[0].mxu0 %v270
  %v1277 = vpop.f32.mrb[0].mxu0
  %v1278 = vadd.f32 %v244, %v1277
  %v1279 = vpop.f32.mrb[0].mxu0
  %v1280 = vpop.f32.mrb[0].mxu0
  %v1281 = vadd.f32 %v244, %v1280
  %v1282 = vpop.f32.mrb[0].mxu0
  %1283 = vdwg.mxu0
  %1284 = vmatprep.subr.bf16.mxu0 0
  %1285 = vmatpush1.bf16.msra.mxu0 %v823
  %1286 = vmatprep.subr.bf16.mxu0 0
  %1287 = vmatpush1.bf16.msra.mxu0 %v826
  %1288 = vmatprep.subr.bf16.mxu0 0
  %1289 = vmatpush1.bf16.msra.mxu0 %v829
  %1290 = vmatprep.subr.bf16.mxu0 0
  %1291 = vmatpush1.bf16.msra.mxu0 %v832
  %1292 = vmatprep.subr.bf16.mxu0 0
  %1293 = vmatpush1.bf16.msra.mxu0 %v835
  %1294 = vmatprep.subr.bf16.mxu0 0
  %1295 = vmatpush1.bf16.msra.mxu0 %v838
  %1296 = vmatprep.subr.bf16.mxu0 0
  %1297 = vmatpush1.bf16.msra.mxu0 %v841
  %1298 = vmatprep.subr.bf16.mxu0 0
  %1299 = vmatpush1.bf16.msra.mxu0 %v844
  %1300 = vmatprep.subr.bf16.mxu0 0
  %1301 = vmatpush1.bf16.msra.mxu0 %v847
  %1302 = vmatprep.subr.bf16.mxu0 0
  %1303 = vmatpush1.bf16.msra.mxu0 %v850
  %1304 = vmatprep.subr.bf16.mxu0 0
  %1305 = vmatpush1.bf16.msra.mxu0 %v853
  %1306 = vmatprep.subr.bf16.mxu0 0
  %1307 = vmatpush1.bf16.msra.mxu0 %v856
  %1308 = vmatprep.subr.bf16.mxu0 0
  %1309 = vmatpush1.bf16.msra.mxu0 %v859
  %1310 = vmatprep.subr.bf16.mxu0 0
  %1311 = vmatpush1.bf16.msra.mxu0 %v862
  %1312 = vmatprep.subr.bf16.mxu0 0
  %1313 = vmatpush1.bf16.msra.mxu0 %v865
  %1314 = vmatprep.subr.bf16.mxu0 0
  %1315 = vmatpush1.bf16.msra.mxu0 %v868
  %1316 = vmatprep.mubr.bf16.mxu0 %v273
  %1317 = vmatmul.mubr.bf16.gmra.mrb[0].mxu0 %v272
  %v1318 = vpop.f32.mrb[0].mxu0
  %v1319 = vadd.f32 %v1278, %v1318
  %v1320 = vpop.f32.mrb[0].mxu0
  %v1321 = vpop.f32.mrb[0].mxu0
  %v1322 = vadd.f32 %v1281, %v1321
  %v1323 = vpop.f32.mrb[0].mxu0
  %1324 = vdwg.mxu0
  %1325 = vmatprep.subr.bf16.mxu0 0
  %1326 = vmatpush1.bf16.msra.mxu0 %v871
  %1327 = vmatprep.subr.bf16.mxu0 0
  %1328 = vmatpush1.bf16.msra.mxu0 %v874
  %1329 = vmatprep.subr.bf16.mxu0 0
  %1330 = vmatpush1.bf16.msra.mxu0 %v877
  %1331 = vmatprep.subr.bf16.mxu0 0
  %1332 = vmatpush1.bf16.msra.mxu0 %v880
  %1333 = vmatprep.subr.bf16.mxu0 0
  %1334 = vmatpush1.bf16.msra.mxu0 %v883
  %1335 = vmatprep.subr.bf16.mxu0 0
  %1336 = vmatpush1.bf16.msra.mxu0 %v886
  %1337 = vmatprep.subr.bf16.mxu0 0
  %1338 = vmatpush1.bf16.msra.mxu0 %v889
  %1339 = vmatprep.subr.bf16.mxu0 0
  %1340 = vmatpush1.bf16.msra.mxu0 %v892
  %1341 = vmatprep.subr.bf16.mxu0 0
  %1342 = vmatpush1.bf16.msra.mxu0 %v895
  %1343 = vmatprep.subr.bf16.mxu0 0
  %1344 = vmatpush1.bf16.msra.mxu0 %v898
  %1345 = vmatprep.subr.bf16.mxu0 0
  %1346 = vmatpush1.bf16.msra.mxu0 %v901
  %1347 = vmatprep.subr.bf16.mxu0 0
  %1348 = vmatpush1.bf16.msra.mxu0 %v904
  %1349 = vmatprep.subr.bf16.mxu0 0
  %1350 = vmatpush1.bf16.msra.mxu0 %v907
  %1351 = vmatprep.subr.bf16.mxu0 0
  %1352 = vmatpush1.bf16.msra.mxu0 %v910
  %1353 = vmatprep.subr.bf16.mxu0 0
  %1354 = vmatpush1.bf16.msra.mxu0 %v913
  %1355 = vmatprep.subr.bf16.mxu0 0
  %1356 = vmatpush1.bf16.msra.mxu0 %v916
  %1357 = vmatprep.mubr.bf16.mxu0 %v275
  %1358 = vmatmul.mubr.bf16.gmra.mrb[0].mxu0 %v274
  %v1359 = vpop.f32.mrb[0].mxu0
  %v1360 = vadd.f32 %v1319, %v1359
  %v1361 = vpop.f32.mrb[0].mxu0
  %v1362 = vpop.f32.mrb[0].mxu0
  %v1363 = vadd.f32 %v1322, %v1362
  %v1364 = vpop.f32.mrb[0].mxu0
  %1365 = vdwg.mxu0
  %1366 = vmatprep.subr.bf16.mxu0 0
  %1367 = vmatpush1.bf16.msra.mxu0 %v919
  %1368 = vmatprep.subr.bf16.mxu0 0
  %1369 = vmatpush1.bf16.msra.mxu0 0
  %1370 = vmatprep.subr.bf16.mxu0 0
  %1371 = vmatpush1.bf16.msra.mxu0 0
  %1372 = vmatprep.subr.bf16.mxu0 0
  %1373 = vmatpush1.bf16.msra.mxu0 0
  %1374 = vmatprep.subr.bf16.mxu0 0
  %1375 = vmatpush1.bf16.msra.mxu0 0
  %1376 = vmatprep.subr.bf16.mxu0 0
  %1377 = vmatpush1.bf16.msra.mxu0 0
  %1378 = vmatprep.subr.bf16.mxu0 0
  %1379 = vmatpush1.bf16.msra.mxu0 0
  %1380 = vmatprep.subr.bf16.mxu0 0
  %1381 = vmatpush1.bf16.msra.mxu0 0
  %1382 = vmatprep.subr.bf16.mxu0 0
  %1383 = vmatpush1.bf16.msra.mxu0 0
  %1384 = vmatprep.subr.bf16.mxu0 0
  %1385 = vmatpush1.bf16.msra.mxu0 0
  %1386 = vmatprep.subr.bf16.mxu0 0
  %1387 = vmatpush1.bf16.msra.mxu0 0
  %1388 = vmatprep.subr.bf16.mxu0 0
  %1389 = vmatpush1.bf16.msra.mxu0 0
  %1390 = vmatprep.subr.bf16.mxu0 0
  %1391 = vmatpush1.bf16.msra.mxu0 0
  %1392 = vmatprep.subr.bf16.mxu0 0
  %1393 = vmatpush1.bf16.msra.mxu0 0
  %1394 = vmatprep.subr.bf16.mxu0 0
  %1395 = vmatpush1.bf16.msra.mxu0 0
  %1396 = vmatprep.subr.bf16.mxu0 0
  %1397 = vmatpush1.bf16.msra.mxu0 0
  %1398 = vmatprep.mubr.bf16.mxu0 0
  %1399 = vmatmul.mubr.bf16.gmra.mrb[0].mxu0 %v1069
  %v1400 = vpop.f32.mrb[0].mxu0
  %v1401 = vadd.f32 %v1360, %v1400
  %v1402 = vpop.f32.mrb[0].mxu0
  %v1403 = vpop.f32.mrb[0].mxu0
  %v1404 = vadd.f32 %v1363, %v1403
  %v1405 = vpop.f32.mrb[0].mxu0
  %1406 = vdwg.mxu0
  %v1407 = vmax.f32 %v1235, 0.0
  %v1408 = vmax.f32 %v1237, 0.0
  %v1409 = vmax.f32 %v1401, 0.0
  %v1410 = vmax.f32 %v1239, 0.0
  %v1411 = vmax.f32 %v1241, 0.0
  %v1412 = vmax.f32 %v1404, 0.0
  %v1413 = vpack.c.bf16 %v1410, %v1407
  %v1414 = vpack.c.bf16 %v1411, %v1408
  %v1415 = vpack.c.bf16 %v1412, %v1409
  %v1416 = vld [vmem:[%s3] sm:$0xf]
  %v1417 = vld [vmem:[%s3 + $0x4] sm:$0xf]
  %v1418 = vld [vmem:[%s3 + $0x8] sm:$0xf]
  %v1419 = vld [vmem:[%s3 + $0xc] sm:$0xf]
  %v1420 = vld [vmem:[%s3 + $0x10] sm:$0xf]
  %v1421 = vld [vmem:[%s3 + $0x14] sm:$0xf]
  %v1422 = vld [vmem:[%s3 + $0x18] sm:$0xf]
  %v1423 = vld [vmem:[%s3 + $0x1c] sm:$0xf]
  %v1424 = vld [vmem:[%s3 + $0x20] sm:$0xf]
  %v1425 = vld [vmem:[%s3 + $0x24] sm:$0xf]
  %v1426 = vld [vmem:[%s3 + $0x28] sm:$0xf]
  %v1427 = vld [vmem:[%s3 + $0x2c] sm:$0xf]
  %v1428 = vld [vmem:[%s3 + $0x30] sm:$0xf]
  %v1429 = vld [vmem:[%s3 + $0x34] sm:$0xf]
  %v1430 = vld [vmem:[%s3 + $0x38] sm:$0xf]
  %v1431 = vld [vmem:[%s3 + $0x3c] sm:$0xf]
  %v1432 = vld [vmem:[%s3 + $0x40] sm:$0xf]
  %v1433 = vld [vmem:[%s3 + $0x44] sm:$0xf]
  %v1434 = vld [vmem:[%s3 + $0x48] sm:$0xf]
  %v1435 = vld [vmem:[%s3 + $0x4c] sm:$0xf]
  %v1436 = vld [vmem:[%s3 + $0x50] sm:$0xf]
  %v1437 = vld [vmem:[%s3 + $0x54] sm:$0xf]
  %v1438 = vld [vmem:[%s3 + $0x58] sm:$0xf]
  %v1439 = vld [vmem:[%s3 + $0x5c] sm:$0xf]
  %v1440 = vld [vmem:[%s3 + $0x60] sm:$0xf]
  %v1441 = vld [vmem:[%s3 + $0x64] sm:$0xf]
  %v1442 = vld [vmem:[%s3 + $0x68] sm:$0xf]
  %v1443 = vld [vmem:[%s3 + $0x6c] sm:$0xf]
  %v1444 = vld [vmem:[%s3 + $0x70] sm:$0xf]
  %v1445 = vld [vmem:[%s3 + $0x74] sm:$0xf]
  %v1446 = vld [vmem:[%s3 + $0x78] sm:$0xf]
  %v1447 = vld [vmem:[%s3 + $0x7c] sm:$0xf]
  %v1448 = vld [vmem:[%s3 + $0x80] sm:$0xf]
  %v1449 = vld [vmem:[%s3 + $0x84] sm:$0xf]
  %v1450 = vld [vmem:[%s3 + $0x88] sm:$0xf]
  %v1451 = vld [vmem:[%s3 + $0x8c] sm:$0xf]
  %v1452 = vld [vmem:[%s3 + $0x90] sm:$0xf]
  %v1453 = vld [vmem:[%s3 + $0x94] sm:$0x3]
  %v1454 = vld [vmem:[%s4] sm:$0x1]
  %v1456 = vlaneseq
  %v1457 = vshrl.u32 %v1456, 7
  %v1458 = vsub.s32 0, %v1457
  %v1459 = vrot.slane %v1454, %v1458
  %v1499 = vunpack.c.l.b16 %v1416
  %v1500 = vunpack.c.l.b16 %v1417
  %v1501 = vunpack.c.l.b16 %v1418
  %v1502 = vunpack.c.l.b16 %v1419
  %v1503 = vunpack.c.l.b16 %v1420
  %v1504 = vunpack.c.l.b16 %v1421
  %v1505 = vunpack.c.l.b16 %v1422
  %v1506 = vunpack.c.l.b16 %v1423
  %v1507 = vunpack.c.l.b16 %v1424
  %v1508 = vunpack.c.l.b16 %v1425
  %v1509 = vunpack.c.l.b16 %v1426
  %v1510 = vunpack.c.l.b16 %v1427
  %v1511 = vunpack.c.l.b16 %v1428
  %v1512 = vunpack.c.l.b16 %v1429
  %v1513 = vunpack.c.l.b16 %v1430
  %v1514 = vunpack.c.l.b16 %v1431
  %v1515 = vunpack.c.l.b16 %v1432
  %v1516 = vunpack.c.l.b16 %v1433
  %v1517 = vunpack.c.l.b16 %v1434
  %v1518 = vunpack.c.l.b16 %v1435
  %v1519 = vunpack.c.l.b16 %v1436
  %v1520 = vunpack.c.l.b16 %v1437
  %v1521 = vunpack.c.l.b16 %v1438
  %v1522 = vunpack.c.l.b16 %v1439
  %v1523 = vunpack.c.l.b16 %v1440
  %v1524 = vunpack.c.l.b16 %v1441
  %v1525 = vunpack.c.l.b16 %v1442
  %v1526 = vunpack.c.l.b16 %v1443
  %v1527 = vunpack.c.l.b16 %v1444
  %v1528 = vunpack.c.l.b16 %v1445
  %v1529 = vunpack.c.l.b16 %v1446
  %v1530 = vunpack.c.l.b16 %v1447
  %v1531 = vunpack.c.l.b16 %v1448
  %v1532 = vunpack.c.l.b16 %v1449
  %v1533 = vunpack.c.l.b16 %v1450
  %v1534 = vunpack.c.l.b16 %v1451
  %v1535 = vunpack.c.l.b16 %v1452
  %v1536 = vunpack.c.l.b16 %v1453
  %v1537 = vpack.c.b16 %v1500, %v1499
  %v1538 = vpack.c.b16 %v1502, %v1501
  %v1539 = vpack.c.b16 %v1504, %v1503
  %v1540 = vpack.c.b16 %v1506, %v1505
  %v1541 = vpack.c.b16 %v1508, %v1507
  %v1542 = vpack.c.b16 %v1510, %v1509
  %v1543 = vpack.c.b16 %v1512, %v1511
  %v1544 = vpack.c.b16 %v1514, %v1513
  %v1545 = vpack.c.b16 %v1516, %v1515
  %v1546 = vpack.c.b16 %v1518, %v1517
  %v1547 = vpack.c.b16 %v1520, %v1519
  %v1548 = vpack.c.b16 %v1522, %v1521
  %v1549 = vpack.c.b16 %v1524, %v1523
  %v1550 = vpack.c.b16 %v1526, %v1525
  %v1551 = vpack.c.b16 %v1528, %v1527
  %v1552 = vpack.c.b16 %v1530, %v1529
  %v1553 = vpack.c.b16 %v1532, %v1531
  %v1554 = vpack.c.b16 %v1534, %v1533
  %v1555 = vpack.c.b16 %v1536, %v1535
  %vm1574 = vcmask 359424
  %v1576 = vsel %vm1574, %v1415, 0
  %vm1578 = vcmask 1045504
  %v1580 = vsel %vm1578, %v1555, 0
  %1582 = vmatprep.subr.bf16.mxu0 0
  %1583 = vmatpush1.bf16.msra.mxu0 %v1537
  %1584 = vmatprep.subr.bf16.mxu0 0
  %1585 = vmatpush1.bf16.msra.mxu0 %v1538
  %1586 = vmatprep.subr.bf16.mxu0 0
  %1587 = vmatpush1.bf16.msra.mxu0 %v1539
  %1588 = vmatprep.subr.bf16.mxu0 0
  %1589 = vmatpush1.bf16.msra.mxu0 %v1540
  %1590 = vmatprep.subr.bf16.mxu0 0
  %1591 = vmatpush1.bf16.msra.mxu0 %v1541
  %1592 = vmatprep.subr.bf16.mxu0 0
  %1593 = vmatpush1.bf16.msra.mxu0 %v1542
  %1594 = vmatprep.subr.bf16.mxu0 0
  %1595 = vmatpush1.bf16.msra.mxu0 %v1543
  %1596 = vmatprep.subr.bf16.mxu0 0
  %1597 = vmatpush1.bf16.msra.mxu0 %v1544
  %1598 = vmatprep.subr.bf16.mxu0 0
  %1599 = vmatpush1.bf16.msra.mxu0 %v1545
  %1600 = vmatprep.subr.bf16.mxu0 0
  %1601 = vmatpush1.bf16.msra.mxu0 %v1546
  %1602 = vmatprep.subr.bf16.mxu0 0
  %1603 = vmatpush1.bf16.msra.mxu0 %v1547
  %1604 = vmatprep.subr.bf16.mxu0 0
  %1605 = vmatpush1.bf16.msra.mxu0 %v1548
  %1606 = vmatprep.subr.bf16.mxu0 0
  %1607 = vmatpush1.bf16.msra.mxu0 %v1549
  %1608 = vmatprep.subr.bf16.mxu0 0
  %1609 = vmatpush1.bf16.msra.mxu0 %v1550
  %1610 = vmatprep.subr.bf16.mxu0 0
  %1611 = vmatpush1.bf16.msra.mxu0 %v1551
  %1612 = vmatprep.subr.bf16.mxu0 0
  %1613 = vmatpush1.bf16.msra.mxu0 %v1552
  %1614 = vmatprep.mubr.bf16.mxu0 %v1414
  %1615 = vmatmul.mubr.bf16.gmra.mrb[0].mxu0 %v1413
  %v1616 = vpop.f32.mrb[0].mxu0
  %v1617 = vadd.f32 %v1459, %v1616
  %v1618 = vpop.f32.mrb[0].mxu0
  %v1619 = vpop.f32.mrb[0].mxu0
  %v1620 = vadd.f32 %v1459, %v1619
  %v1621 = vpop.f32.mrb[0].mxu0
  %1622 = vdwg.mxu0
  %1623 = vmatprep.subr.bf16.mxu0 0
  %1624 = vmatpush1.bf16.msra.mxu0 %v1553
  %1625 = vmatprep.subr.bf16.mxu0 0
  %1626 = vmatpush1.bf16.msra.mxu0 %v1554
  %1627 = vmatprep.subr.bf16.mxu0 0
  %1628 = vmatpush1.bf16.msra.mxu0 %v1580
  %1629 = vmatprep.subr.bf16.mxu0 0
  %1630 = vmatpush1.bf16.msra.mxu0 0
  %1631 = vmatprep.subr.bf16.mxu0 0
  %1632 = vmatpush1.bf16.msra.mxu0 0
  %1633 = vmatprep.subr.bf16.mxu0 0
  %1634 = vmatpush1.bf16.msra.mxu0 0
  %1635 = vmatprep.subr.bf16.mxu0 0
  %1636 = vmatpush1.bf16.msra.mxu0 0
  %1637 = vmatprep.subr.bf16.mxu0 0
  %1638 = vmatpush1.bf16.msra.mxu0 0
  %1639 = vmatprep.subr.bf16.mxu0 0
  %1640 = vmatpush1.bf16.msra.mxu0 0
  %1641 = vmatprep.subr.bf16.mxu0 0
  %1642 = vmatpush1.bf16.msra.mxu0 0
  %1643 = vmatprep.subr.bf16.mxu0 0
  %1644 = vmatpush1.bf16.msra.mxu0 0
  %1645 = vmatprep.subr.bf16.mxu0 0
  %1646 = vmatpush1.bf16.msra.mxu0 0
  %1647 = vmatprep.subr.bf16.mxu0 0
  %1648 = vmatpush1.bf16.msra.mxu0 0
  %1649 = vmatprep.subr.bf16.mxu0 0
  %1650 = vmatpush1.bf16.msra.mxu0 0
  %1651 = vmatprep.subr.bf16.mxu0 0
  %1652 = vmatpush1.bf16.msra.mxu0 0
  %1653 = vmatprep.subr.bf16.mxu0 0
  %1654 = vmatpush1.bf16.msra.mxu0 0
  %1655 = vmatprep.mubr.bf16.mxu0 0
  %1656 = vmatmul.mubr.bf16.gmra.mrb[0].mxu0 %v1576
  %v1657 = vpop.f32.mrb[0].mxu0
  %v1658 = vadd.f32 %v1617, %v1657
  %v1659 = vpop.f32.mrb[0].mxu0
  %v1660 = vpop.f32.mrb[0].mxu0
  %v1661 = vadd.f32 %v1620, %v1660
  %v1662 = vpop.f32.mrb[0].mxu0
  %1663 = vdwg.mxu0
  %v1664 = vmax.f32 %v1658, 0.0
  %v1665 = vmax.f32 %v1661, 0.0
  %v1666 = vpack.c.bf16 %v1665, %v1664
  %v1667 = vld [vmem:[%s5] sm:$0xf]
  %v1668 = vld [vmem:[%s5 + $0x4] sm:$0xf]
  %v1669 = vld [vmem:[%s5 + $0x8] sm:$0xf]
  %v1670 = vld [vmem:[%s5 + $0xc] sm:$0xf]
  %v1671 = vld [vmem:[%s5 + $0x10] sm:$0xf]
  %v1672 = vld [vmem:[%s5 + $0x14] sm:$0xf]
  %v1673 = vld [vmem:[%s5 + $0x18] sm:$0xf]
  %v1674 = vld [vmem:[%s5 + $0x1c] sm:$0xf]
  %v1675 = vld [vmem:[%s5 + $0x20] sm:$0xf]
  %v1676 = vld [vmem:[%s5 + $0x24] sm:$0xf]
  %v1677 = vld [vmem:[%s5 + $0x28] sm:$0xf]
  %v1678 = vld [vmem:[%s5 + $0x2c] sm:$0xf]
  %v1679 = vld [vmem:[%s5 + $0x30] sm:$0x3]
  %v1680 = vld [vmem:[%s6] sm:$0x1]
  %v1682 = vlaneseq
  %v1683 = vshrl.u32 %v1682, 7
  %v1684 = vsub.s32 0, %v1683
  %v1685 = vrot.slane %v1680, %v1684
  %v1700 = vunpack.c.l.b16 %v1667
  %v1701 = vunpack.c.l.b16 %v1668
  %v1702 = vunpack.c.l.b16 %v1669
  %v1703 = vunpack.c.l.b16 %v1670
  %v1704 = vunpack.c.l.b16 %v1671
  %v1705 = vunpack.c.l.b16 %v1672
  %v1706 = vunpack.c.l.b16 %v1673
  %v1707 = vunpack.c.l.b16 %v1674
  %v1708 = vunpack.c.l.b16 %v1675
  %v1709 = vunpack.c.l.b16 %v1676
  %v1710 = vunpack.c.l.b16 %v1677
  %v1711 = vunpack.c.l.b16 %v1678
  %v1712 = vunpack.c.l.b16 %v1679
  %v1713 = vpack.c.b16 %v1701, %v1700
  %v1714 = vpack.c.b16 %v1703, %v1702
  %v1715 = vpack.c.b16 %v1705, %v1704
  %v1716 = vpack.c.b16 %v1707, %v1706
  %v1717 = vpack.c.b16 %v1709, %v1708
  %v1718 = vpack.c.b16 %v1711, %v1710
  %v1719 = vpack.c.b16 %v1712, %v1712
  %vm1726 = vcmask 818176
  %v1728 = vsel %vm1726, %v1666, 0
  %vm1730 = vcmask 1041408
  %v1732 = vsel %vm1730, %v1719, 0
  %1734 = vmatprep.subr.bf16.mxu0 0
  %1735 = vmatpush1.bf16.msra.mxu0 %v1713
  %1736 = vmatprep.subr.bf16.mxu0 0
  %1737 = vmatpush1.bf16.msra.mxu0 %v1714
  %1738 = vmatprep.subr.bf16.mxu0 0
  %1739 = vmatpush1.bf16.msra.mxu0 %v1715
  %1740 = vmatprep.subr.bf16.mxu0 0
  %1741 = vmatpush1.bf16.msra.mxu0 %v1716
  %1742 = vmatprep.subr.bf16.mxu0 0
  %1743 = vmatpush1.bf16.msra.mxu0 %v1717
  %1744 = vmatprep.subr.bf16.mxu0 0
  %1745 = vmatpush1.bf16.msra.mxu0 %v1718
  %1746 = vmatprep.subr.bf16.mxu0 0
  %1747 = vmatpush1.bf16.msra.mxu0 %v1732
  %1748 = vmatprep.subr.bf16.mxu0 0
  %1749 = vmatpush1.bf16.msra.mxu0 0
  %1750 = vmatprep.subr.bf16.mxu0 0
  %1751 = vmatpush1.bf16.msra.mxu0 0
  %1752 = vmatprep.subr.bf16.mxu0 0
  %1753 = vmatpush1.bf16.msra.mxu0 0
  %1754 = vmatprep.subr.bf16.mxu0 0
  %1755 = vmatpush1.bf16.msra.mxu0 0
  %1756 = vmatprep.subr.bf16.mxu0 0
  %1757 = vmatpush1.bf16.msra.mxu0 0
  %1758 = vmatprep.subr.bf16.mxu0 0
  %1759 = vmatpush1.bf16.msra.mxu0 0
  %1760 = vmatprep.subr.bf16.mxu0 0
  %1761 = vmatpush1.bf16.msra.mxu0 0
  %1762 = vmatprep.subr.bf16.mxu0 0
  %1763 = vmatpush1.bf16.msra.mxu0 0
  %1764 = vmatprep.subr.bf16.mxu0 0
  %1765 = vmatpush1.bf16.msra.mxu0 0
  %1766 = vmatprep.mubr.bf16.mxu0 0
  %1767 = vmatmul.mubr.bf16.gmra.mrb[0].mxu0 %v1728
  %v1768 = vpop.f32.mrb[0].mxu0
  %v1769 = vadd.f32 %v1685, %v1768
  %v1770 = vpop.f32.mrb[0].mxu0
  %v1771 = vpop.f32.mrb[0].mxu0
  %v1772 = vadd.f32 %v1685, %v1771
  %v1773 = vpop.f32.mrb[0].mxu0
  %1774 = vdwg.mxu0
  %1775 = vst [vmem:[%s7] sm:$0xff] %v1769
  %1776 = vst [vmem:[%s7 + $0x8] sm:$0xff] %v1772
  // Predicated region
  $region30: #{mlp_forward.1} parent=0 // pred_check
    _
  $region31: #{mlp_forward.1} parent=0 // pred_check_branch
    %1778 = sbr.rel (0) target = $region33
  $region32: #{mlp_forward.1} parent=0 // pred_region
    _
  $region33: #{mlp_forward.1} parent=0 // pred_fallthru
    _
  // Predicated region
  $region34: #{mlp_forward.1} parent=0 // pred_check
    _
  $region35: #{mlp_forward.1} parent=0 // pred_check_branch
    %1780 = sbr.rel (0) target = $region37
  $region36: #{mlp_forward.1} parent=0 // pred_region
    _
  $region37: #{mlp_forward.1} parent=0 // pred_fallthru
    _

</llo_original>
